<compile_context>
chip_gen: v7x
topology: tpu7x:2x2x1
jax: 0.10.0
libtpu: 0.0.40
codegen_flags: <defaults>
</compile_context>

<pallas_src>
import jax
import jax.numpy as jnp
from jax import lax
from jax.experimental import pallas as pl
from jax.experimental.pallas import tpu as pltpu


def _clip_bce_kernel(scale_ref, wclip_ref, wbce_ref,
                     text_ref, label_full_ref, label_blk_ref,
                     out_ref,
                     col_max_ref, col_sum_ref,
                     rowlse_acc, diag_acc, sp_acc):
    i = pl.program_id(0)
    last = pl.num_programs(0) - 1

    @pl.when(i == 0)
    def _init():
        col_max_ref[...] = jnp.full_like(col_max_ref, -jnp.inf)
        col_sum_ref[...] = jnp.zeros_like(col_sum_ref)
        rowlse_acc[0, 0] = jnp.float32(0.0)
        diag_acc[0, 0] = jnp.float32(0.0)
        sp_acc[0, 0] = jnp.float32(0.0)

    scale = scale_ref[0, 0]

    # [TM, N] logits strip: native-dtype operands straight into the MXU,
    # contracting dim 1 of both sides (no transpose), f32 accumulation.
    logits = scale * lax.dot_general(
        text_ref[...], label_full_ref[...],
        dimension_numbers=(((1,), (1,)), ((), ())),
        preferred_element_type=jnp.float32)                      # [TM, N] f32

    # Diagonal chunk straight from the features (O(TM*D); no eye/iota mask).
    tb32 = text_ref[...].astype(jnp.float32)
    lb32 = label_blk_ref[...].astype(jnp.float32)
    diag_acc[0, 0] = diag_acc[0, 0] + scale * jnp.sum(tb32 * lb32)

    # ---- text -> label direction: rows are complete inside the strip ----
    row_max = jnp.max(logits, axis=-1, keepdims=True)            # [TM, 1]
    row_sum = jnp.sum(jnp.exp(logits - row_max), axis=-1, keepdims=True)
    rowlse_acc[0, 0] = rowlse_acc[0, 0] + jnp.sum(jnp.log(row_sum) + row_max)

    # ---- label -> text direction: online-softmax column accumulators ----
    blk_col_max = jnp.max(logits, axis=0, keepdims=True)         # [1, N]
    m_old = col_max_ref[...]
    m_new = jnp.maximum(m_old, blk_col_max)
    col_contrib = jnp.sum(jnp.exp(logits - m_new), axis=0, keepdims=True)
    col_sum_ref[...] = col_sum_ref[...] * jnp.exp(m_old - m_new) + col_contrib
    col_max_ref[...] = m_new

    # ---- BCE-with-logits, targets = eye(N) ----
    # stable form: max(x,0) - x*y + log1p(exp(-|x|)); the "-x*y" part sums to
    # -diag_sum, which is applied at finalization.
    sp = jnp.maximum(logits, 0.0) + jnp.log1p(jnp.exp(-jnp.abs(logits)))
    sp_acc[0, 0] = sp_acc[0, 0] + jnp.sum(sp)

    @pl.when(i == last)
    def _finalize():
        n = col_sum_ref.shape[-1]
        col_lse_sum = jnp.sum(jnp.log(col_sum_ref[...]) + col_max_ref[...])
        dsum = diag_acc[0, 0]
        clip_loss = 0.5 * ((rowlse_acc[0, 0] - dsum)
                           + (col_lse_sum - dsum)) * (1.0 / n)
        bce_loss = (sp_acc[0, 0] - dsum) * (1.0 / (n * n))
        out_ref[0, 0] = wclip_ref[0, 0] * clip_loss + wbce_ref[0, 0] * bce_loss


def _pick_tm(n):
    # Prefer 256 (fills v6e/v7x 256-wide MXU), then 128 (v5e MXU granule).
    for tm in (256, 128, 64, 32, 16, 8):
        if n % tm == 0:
            return tm
    return n  # ragged batch: single full-height strip


def clip_bce_loss(text_features, label_features, logit_scale,
                  clip_loss_weight=None, bce_loss_weight=None,
                  weight_key=None, tm=None):
    """Pallas-backed CLIPBCELoss.forward.

    text_features, label_features: [N, D] arrays (bf16 or f32; fed to the MXU
    in their native dtype).  logit_scale: scalar.
    """
    n, d = text_features.shape
    assert label_features.shape == (n, d)

    # Task-weighting glue (matches the PyTorch module, including the upstream
    # bug where BOTH terms use weights[0] when no fixed weights are given).
    if clip_loss_weight is None or bce_loss_weight is None:
        if weight_key is None:
            weight_key = jax.random.PRNGKey(0)
        weights = jax.nn.softmax(jax.random.normal(weight_key, (2,)))
        if clip_loss_weight is None:
            clip_loss_weight = weights[0]
        if bce_loss_weight is None:
            bce_loss_weight = weights[0]  # bug preserved from reference module

    tm = _pick_tm(n) if tm is None else tm
    assert n % tm == 0 and (tm % 8 == 0 or tm == n)
    steps = n // tm

    scale = jnp.asarray(logit_scale, jnp.float32).reshape(1, 1)
    wclip = jnp.asarray(clip_loss_weight, jnp.float32).reshape(1, 1)
    wbce = jnp.asarray(bce_loss_weight, jnp.float32).reshape(1, 1)

    itemsize = jnp.dtype(text_features.dtype).itemsize
    # Rough live-VMEM estimate for the chosen tile; keep the scoped limit
    # modest so it also fits v7x (64 MiB physical VMEM).
    need = ((2 * n * d + 4 * tm * d) * itemsize
            + 8 * tm * n * 4 + 8 * n * 4 + (2 << 20))
    vmem_limit = int(min(max(need, 16 << 20), 64 << 20))

    cost = pl.CostEstimate(
        flops=2 * n * n * d,
        transcendentals=4 * n * n,
        bytes_accessed=2 * n * d * itemsize + 3 * 4 + 4)

    out = pl.pallas_call(
        _clip_bce_kernel,
        out_shape=jax.ShapeDtypeStruct((1, 1), jnp.float32),
        grid=(steps,),
        in_specs=[
            pl.BlockSpec(memory_space=pltpu.SMEM),        # logit_scale
            pl.BlockSpec(memory_space=pltpu.SMEM),        # clip weight
            pl.BlockSpec(memory_space=pltpu.SMEM),        # bce weight
            pl.BlockSpec((tm, d), lambda i: (i, 0)),      # text row strip
            pl.BlockSpec((n, d), lambda i: (0, 0)),       # labels (resident)
            pl.BlockSpec((tm, d), lambda i: (i, 0)),      # matching label rows
        ],
        out_specs=pl.BlockSpec(memory_space=pltpu.SMEM),  # scalar loss
        scratch_shapes=[
            pltpu.VMEM((1, n), jnp.float32),   # running column max
            pltpu.VMEM((1, n), jnp.float32),   # running column exp-sum
            pltpu.SMEM((1, 1), jnp.float32),   # sum of row LSEs
            pltpu.SMEM((1, 1), jnp.float32),   # sum of diagonal logits
            pltpu.SMEM((1, 1), jnp.float32),   # sum of BCE softplus terms
        ],
        compiler_params=pltpu.CompilerParams(
            dimension_semantics=("arbitrary",),
            vmem_limit_bytes=vmem_limit),
        cost_estimate=cost,
    )(scale, wclip, wbce, text_features, label_features, label_features)
    return out[0, 0]


def _reference(text_features, label_features, logit_scale, wclip, wbce):
    """Plain-JAX f32 reference for a sanity check."""
    t = text_features.astype(jnp.float32)
    lab = label_features.astype(jnp.float32)
    logits = logit_scale * (t @ lab.T)
    n = logits.shape[0]
    idx = jnp.arange(n)
    ce_t = -jnp.mean(jax.nn.log_softmax(logits, axis=-1)[idx, idx])
    ce_i = -jnp.mean(jax.nn.log_softmax(logits.T, axis=-1)[idx, idx])
    clip_l = 0.5 * (ce_t + ce_i)
    tgt = jnp.eye(n)
    bce = jnp.maximum(logits, 0.0) - logits * tgt + jnp.log1p(jnp.exp(-jnp.abs(logits)))
    bce_l = jnp.mean(bce)
    return wclip * clip_l + wbce * bce_l


if __name__ == "__main__":
    key = jax.random.PRNGKey(0)
    k1, k2 = jax.random.split(key)

    N, D = 256, 64
    tf = jax.random.normal(k1, (N, D), jnp.float32)
    lf = jax.random.normal(k2, (N, D), jnp.float32)
    # CLIP-style L2 normalization of the feature embeddings.
    tf = tf / jnp.linalg.norm(tf, axis=-1, keepdims=True)
    lf = lf / jnp.linalg.norm(lf, axis=-1, keepdims=True)
    # bf16 features: fed in their native dtype straight to the MXU.
    tf_bf = tf.astype(jnp.bfloat16)
    lf_bf = lf.astype(jnp.bfloat16)
    logit_scale = jnp.float32(14.285715)  # ~exp(log(1/0.07))

    # Deterministic fixed task weights (avoids the randn path being stochastic).
    clip_w, bce_w = 0.6, 0.4

    # tm=128 -> grid of 2 row strips, exercising the online column accumulators.
    out = clip_bce_loss(tf_bf, lf_bf, logit_scale,
                        clip_loss_weight=clip_w, bce_loss_weight=bce_w, tm=128)
    out = jax.block_until_ready(out)

    ref = _reference(tf_bf, lf_bf, logit_scale, clip_w, bce_w)
    assert jnp.allclose(out, ref, rtol=2e-3, atol=2e-3), (out, ref)

    print("KERNEL_OK")
</pallas_src>

<mosaic_0001>
module attributes {stable_mosaic.version = 11 : i64} {
  func.func @_clip_bce_kernel(%arg0: i32, %arg1: memref<1x1xf32, #tpu.memory_space<smem>>, %arg2: memref<1x1xf32, #tpu.memory_space<smem>>, %arg3: memref<1x1xf32, #tpu.memory_space<smem>>, %arg4: memref<128x64xbf16, #tpu.memory_space<vmem>>, %arg5: memref<256x64xbf16, #tpu.memory_space<vmem>>, %arg6: memref<128x64xbf16, #tpu.memory_space<vmem>>, %arg7: memref<1x1xf32, #tpu.memory_space<smem>>, %arg8: memref<1x256xf32, #tpu.memory_space<vmem>>, %arg9: memref<1x256xf32, #tpu.memory_space<vmem>>, %arg10: memref<1x1xf32, #tpu.memory_space<smem>>, %arg11: memref<1x1xf32, #tpu.memory_space<smem>>, %arg12: memref<1x1xf32, #tpu.memory_space<smem>>) attributes {dimension_semantics = [#tpu.dimension_semantics<arbitrary>], iteration_bounds = array<i64: 2>, scalar_prefetch = 0 : i64, scratch_operands = 5 : i64, tpu.core_type = #tpu.core_type<tc>, window_params = [{transform_indices = @transform_0, window_bounds = array<i64: 1, 1>}, {transform_indices = @transform_1, window_bounds = array<i64: 1, 1>}, {transform_indices = @transform_2, window_bounds = array<i64: 1, 1>}, {transform_indices = @transform_3, window_bounds = array<i64: 128, 64>}, {pipeline_mode = #tpu.pipeline_mode<synchronous>, transform_indices = @transform_4, window_bounds = array<i64: 256, 64>}, {transform_indices = @transform_5, window_bounds = array<i64: 128, 64>}, {transform_indices = @transform_6, window_bounds = array<i64: 1, 1>}]} {
    %c0_i32 = arith.constant 0 : i32
    %0 = arith.cmpi eq, %arg0, %c0_i32 : i32
    %1 = arith.extui %0 : i1 to i32
    %c0_i32_0 = arith.constant 0 : i32
    %2 = arith.cmpi ne, %1, %c0_i32_0 : i32
    scf.if %2 {
      %cst_40 = arith.constant 0xFF800000 : f32
      %72 = vector.broadcast %cst_40 : f32 to vector<1x256xf32>
      %c0_41 = arith.constant 0 : index
      %c0_42 = arith.constant 0 : index
      %73 = vector.load %arg8[%c0_41, %c0_42] : memref<1x256xf32, #tpu.memory_space<vmem>>, vector<1x256xf32>
      tpu.vector_store %arg8[%c0_41, %c0_42], %72 {strides = array<i32>} : memref<1x256xf32, #tpu.memory_space<vmem>>, vector<1x256xf32>,
      %cst_43 = arith.constant 0.000000e+00 : f32
      %74 = vector.broadcast %cst_43 : f32 to vector<1x256xf32>
      %c0_44 = arith.constant 0 : index
      %c0_45 = arith.constant 0 : index
      %75 = vector.load %arg9[%c0_44, %c0_45] : memref<1x256xf32, #tpu.memory_space<vmem>>, vector<1x256xf32>
      tpu.vector_store %arg9[%c0_44, %c0_45], %74 {strides = array<i32>} : memref<1x256xf32, #tpu.memory_space<vmem>>, vector<1x256xf32>,
      %cst_46 = arith.constant 0.000000e+00 : f32
      %c0_47 = arith.constant 0 : index
      %c0_48 = arith.constant 0 : index
      %76 = memref.load %arg10[%c0_47, %c0_48] : memref<1x1xf32, #tpu.memory_space<smem>>
      memref.store %cst_46, %arg10[%c0_47, %c0_48] : memref<1x1xf32, #tpu.memory_space<smem>>
      %cst_49 = arith.constant 0.000000e+00 : f32
      %c0_50 = arith.constant 0 : index
      %c0_51 = arith.constant 0 : index
      %77 = memref.load %arg11[%c0_50, %c0_51] : memref<1x1xf32, #tpu.memory_space<smem>>
      memref.store %cst_49, %arg11[%c0_50, %c0_51] : memref<1x1xf32, #tpu.memory_space<smem>>
      %cst_52 = arith.constant 0.000000e+00 : f32
      %c0_53 = arith.constant 0 : index
      %c0_54 = arith.constant 0 : index
      %78 = memref.load %arg12[%c0_53, %c0_54] : memref<1x1xf32, #tpu.memory_space<smem>>
      memref.store %cst_52, %arg12[%c0_53, %c0_54] : memref<1x1xf32, #tpu.memory_space<smem>>
    } else {
    }
    %c0 = arith.constant 0 : index
    %c0_1 = arith.constant 0 : index
    %3 = memref.load %arg1[%c0, %c0_1] : memref<1x1xf32, #tpu.memory_space<smem>>
    %c0_2 = arith.constant 0 : index
    %c0_3 = arith.constant 0 : index
    %4 = vector.load %arg4[%c0_2, %c0_3] : memref<128x64xbf16, #tpu.memory_space<vmem>>, vector<128x64xbf16>
    %c0_4 = arith.constant 0 : index
    %c0_5 = arith.constant 0 : index
    %5 = vector.load %arg5[%c0_4, %c0_5] : memref<256x64xbf16, #tpu.memory_space<vmem>>, vector<256x64xbf16>
    %cst = arith.constant dense<0.000000e+00> : vector<128x256xf32>
    %6 = tpu.matmul %4, %5, %cst {dimension_numbers = #tpu.dot_dimension_numbers<[1], [1], [0], [0], [0, 0, 1, 0], [], []>} : vector<128x64xbf16>, vector<256x64xbf16>, vector<128x256xf32> -> vector<128x256xf32>
    %7 = vector.broadcast %3 : f32 to vector<128x256xf32>
    %8 = arith.mulf %7, %6 : vector<128x256xf32>
    %c0_6 = arith.constant 0 : index
    %c0_7 = arith.constant 0 : index
    %9 = vector.load %arg4[%c0_6, %c0_7] : memref<128x64xbf16, #tpu.memory_space<vmem>>, vector<128x64xbf16>
    %10 = arith.extf %9 : vector<128x64xbf16> to vector<128x64xf32>
    %c0_8 = arith.constant 0 : index
    %c0_9 = arith.constant 0 : index
    %11 = vector.load %arg6[%c0_8, %c0_9] : memref<128x64xbf16, #tpu.memory_space<vmem>>, vector<128x64xbf16>
    %12 = arith.extf %11 : vector<128x64xbf16> to vector<128x64xf32>
    %c0_10 = arith.constant 0 : index
    %c0_11 = arith.constant 0 : index
    %13 = memref.load %arg11[%c0_10, %c0_11] : memref<1x1xf32, #tpu.memory_space<smem>>
    %14 = arith.mulf %10, %12 : vector<128x64xf32>
    %15 = vector.shape_cast %14 : vector<128x64xf32> to vector<1x128x64xf32>
    %cst_12 = arith.constant dense<0.000000e+00> : vector<1xf32>
    %16 = vector.multi_reduction <add>, %15, %cst_12 [1, 2] : vector<1x128x64xf32> to vector<1xf32>
    %17 = vector.shape_cast %16 : vector<1xf32> to vector<1x1x1xf32>
    %18 = vector.extract %17[0, 0, 0] : f32 from vector<1x1x1xf32>
    %19 = arith.mulf %3, %18 : f32
    %20 = arith.addf %13, %19 : f32
    %c0_13 = arith.constant 0 : index
    %c0_14 = arith.constant 0 : index
    %21 = memref.load %arg11[%c0_13, %c0_14] : memref<1x1xf32, #tpu.memory_space<smem>>
    memref.store %20, %arg11[%c0_13, %c0_14] : memref<1x1xf32, #tpu.memory_space<smem>>
    %cst_15 = arith.constant dense<0xFF800000> : vector<128xf32>
    %22 = vector.multi_reduction <maximumf>, %8, %cst_15 [1] : vector<128x256xf32> to vector<128xf32>
    %23 = vector.shape_cast %22 : vector<128xf32> to vector<128x1xf32>
    %24 = vector.broadcast %23 : vector<128x1xf32> to vector<128x256xf32>
    %25 = arith.subf %8, %24 : vector<128x256xf32>
    %26 = math.exp %25 : vector<128x256xf32>
    %cst_16 = arith.constant dense<0.000000e+00> : vector<128xf32>
    %27 = vector.multi_reduction <add>, %26, %cst_16 [1] : vector<128x256xf32> to vector<128xf32>
    %28 = vector.shape_cast %27 : vector<128xf32> to vector<128x1xf32>
    %c0_17 = arith.constant 0 : index
    %c0_18 = arith.constant 0 : index
    %29 = memref.load %arg10[%c0_17, %c0_18] : memref<1x1xf32, #tpu.memory_space<smem>>
    %30 = math.log %28 : vector<128x1xf32>
    %31 = arith.addf %30, %23 : vector<128x1xf32>
    %32 = vector.shape_cast %31 : vector<128x1xf32> to vector<1x128x1xf32>
    %cst_19 = arith.constant dense<0.000000e+00> : vector<1xf32>
    %33 = vector.multi_reduction <add>, %32, %cst_19 [1, 2] : vector<1x128x1xf32> to vector<1xf32>
    %34 = vector.shape_cast %33 : vector<1xf32> to vector<1x1x1xf32>
    %35 = vector.extract %34[0, 0, 0] : f32 from vector<1x1x1xf32>
    %36 = arith.addf %29, %35 : f32
    %c0_20 = arith.constant 0 : index
    %c0_21 = arith.constant 0 : index
    %37 = memref.load %arg10[%c0_20, %c0_21] : memref<1x1xf32, #tpu.memory_space<smem>>
    memref.store %36, %arg10[%c0_20, %c0_21] : memref<1x1xf32, #tpu.memory_space<smem>>
    %cst_22 = arith.constant dense<0xFF800000> : vector<256xf32>
    %38 = vector.multi_reduction <maximumf>, %8, %cst_22 [0] : vector<128x256xf32> to vector<256xf32>
    %39 = vector.shape_cast %38 : vector<256xf32> to vector<1x256xf32>
    %c0_23 = arith.constant 0 : index
    %c0_24 = arith.constant 0 : index
    %40 = vector.load %arg8[%c0_23, %c0_24] : memref<1x256xf32, #tpu.memory_space<vmem>>, vector<1x256xf32>
    %41 = arith.maximumf %40, %39 : vector<1x256xf32>
    %42 = vector.broadcast %41 : vector<1x256xf32> to vector<128x256xf32>
    %43 = arith.subf %8, %42 : vector<128x256xf32>
    %44 = math.exp %43 : vector<128x256xf32>
    %cst_25 = arith.constant dense<0.000000e+00> : vector<256xf32>
    %45 = vector.multi_reduction <add>, %44, %cst_25 [0] : vector<128x256xf32> to vector<256xf32>
    %46 = vector.shape_cast %45 : vector<256xf32> to vector<1x256xf32>
    %c0_26 = arith.constant 0 : index
    %c0_27 = arith.constant 0 : index
    %47 = vector.load %arg9[%c0_26, %c0_27] : memref<1x256xf32, #tpu.memory_space<vmem>>, vector<1x256xf32>
    %48 = arith.subf %40, %41 : vector<1x256xf32>
    %49 = math.exp %48 : vector<1x256xf32>
    %50 = arith.mulf %47, %49 : vector<1x256xf32>
    %51 = arith.addf %50, %46 : vector<1x256xf32>
    %c0_28 = arith.constant 0 : index
    %c0_29 = arith.constant 0 : index
    %52 = vector.load %arg9[%c0_28, %c0_29] : memref<1x256xf32, #tpu.memory_space<vmem>>, vector<1x256xf32>
    tpu.vector_store %arg9[%c0_28, %c0_29], %51 {strides = array<i32>} : memref<1x256xf32, #tpu.memory_space<vmem>>, vector<1x256xf32>,
    %c0_30 = arith.constant 0 : index
    %c0_31 = arith.constant 0 : index
    %53 = vector.load %arg8[%c0_30, %c0_31] : memref<1x256xf32, #tpu.memory_space<vmem>>, vector<1x256xf32>
    tpu.vector_store %arg8[%c0_30, %c0_31], %41 {strides = array<i32>} : memref<1x256xf32, #tpu.memory_space<vmem>>, vector<1x256xf32>,
    %cst_32 = arith.constant 0.000000e+00 : f32
    %54 = vector.broadcast %cst_32 : f32 to vector<128x256xf32>
    %55 = arith.maximumf %8, %54 : vector<128x256xf32>
    %56 = math.absf %8 : vector<128x256xf32>
    %cst_33 = arith.constant 0.000000e+00 : f32
    %57 = vector.broadcast %cst_33 : f32 to vector<128x256xf32>
    %58 = arith.subf %57, %56 : vector<128x256xf32>
    %59 = math.exp %58 : vector<128x256xf32>
    %60 = math.log1p %59 : vector<128x256xf32>
    %61 = arith.addf %55, %60 : vector<128x256xf32>
    %c0_34 = arith.constant 0 : index
    %c0_35 = arith.constant 0 : index
    %62 = memref.load %arg12[%c0_34, %c0_35] : memref<1x1xf32, #tpu.memory_space<smem>>
    %63 = vector.shape_cast %61 : vector<128x256xf32> to vector<1x128x256xf32>
    %cst_36 = arith.constant dense<0.000000e+00> : vector<1xf32>
    %64 = vector.multi_reduction <add>, %63, %cst_36 [1, 2] : vector<1x128x256xf32> to vector<1xf32>
    %65 = vector.shape_cast %64 : vector<1xf32> to vector<1x1x1xf32>
    %66 = vector.extract %65[0, 0, 0] : f32 from vector<1x1x1xf32>
    %67 = arith.addf %62, %66 : f32
    %c0_37 = arith.constant 0 : index
    %c0_38 = arith.constant 0 : index
    %68 = memref.load %arg12[%c0_37, %c0_38] : memref<1x1xf32, #tpu.memory_space<smem>>
    memref.store %67, %arg12[%c0_37, %c0_38] : memref<1x1xf32, #tpu.memory_space<smem>>
    %c1_i32 = arith.constant 1 : i32
    %69 = arith.cmpi eq, %arg0, %c1_i32 : i32
    %70 = arith.extui %69 : i1 to i32
    %c0_i32_39 = arith.constant 0 : i32
    %71 = arith.cmpi ne, %70, %c0_i32_39 : i32
    scf.if %71 {
      %c0_40 = arith.constant 0 : index
      %c0_41 = arith.constant 0 : index
      %72 = vector.load %arg9[%c0_40, %c0_41] : memref<1x256xf32, #tpu.memory_space<vmem>>, vector<1x256xf32>
      %73 = math.log %72 : vector<1x256xf32>
      %c0_42 = arith.constant 0 : index
      %c0_43 = arith.constant 0 : index
      %74 = vector.load %arg8[%c0_42, %c0_43] : memref<1x256xf32, #tpu.memory_space<vmem>>, vector<1x256xf32>
      %75 = arith.addf %73, %74 : vector<1x256xf32>
      %76 = vector.shape_cast %75 : vector<1x256xf32> to vector<1x1x256xf32>
      %cst_44 = arith.constant dense<0.000000e+00> : vector<1xf32>
      %77 = vector.multi_reduction <add>, %76, %cst_44 [1, 2] : vector<1x1x256xf32> to vector<1xf32>
      %78 = vector.shape_cast %77 : vector<1xf32> to vector<1x1x1xf32>
      %79 = vector.extract %78[0, 0, 0] : f32 from vector<1x1x1xf32>
      %c0_45 = arith.constant 0 : index
      %c0_46 = arith.constant 0 : index
      %80 = memref.load %arg11[%c0_45, %c0_46] : memref<1x1xf32, #tpu.memory_space<smem>>
      %c0_47 = arith.constant 0 : index
      %c0_48 = arith.constant 0 : index
      %81 = memref.load %arg10[%c0_47, %c0_48] : memref<1x1xf32, #tpu.memory_space<smem>>
      %82 = arith.subf %81, %80 : f32
      %83 = arith.subf %79, %80 : f32
      %84 = arith.addf %82, %83 : f32
      %cst_49 = arith.constant 5.000000e-01 : f32
      %85 = arith.mulf %cst_49, %84 : f32
      %cst_50 = arith.constant 3.906250e-03 : f32
      %86 = arith.mulf %85, %cst_50 : f32
      %c0_51 = arith.constant 0 : index
      %c0_52 = arith.constant 0 : index
      %87 = memref.load %arg12[%c0_51, %c0_52] : memref<1x1xf32, #tpu.memory_space<smem>>
      %88 = arith.subf %87, %80 : f32
      %cst_53 = arith.constant 1.52587891E-5 : f32
      %89 = arith.mulf %88, %cst_53 : f32
      %c0_54 = arith.constant 0 : index
      %c0_55 = arith.constant 0 : index
      %90 = memref.load %arg2[%c0_54, %c0_55] : memref<1x1xf32, #tpu.memory_space<smem>>
      %91 = arith.mulf %90, %86 : f32
      %c0_56 = arith.constant 0 : index
      %c0_57 = arith.constant 0 : index
      %92 = memref.load %arg3[%c0_56, %c0_57] : memref<1x1xf32, #tpu.memory_space<smem>>
      %93 = arith.mulf %92, %89 : f32
      %94 = arith.addf %91, %93 : f32
      %c0_58 = arith.constant 0 : index
      %c0_59 = arith.constant 0 : index
      %95 = memref.load %arg7[%c0_58, %c0_59] : memref<1x1xf32, #tpu.memory_space<smem>>
      memref.store %94, %arg7[%c0_58, %c0_59] : memref<1x1xf32, #tpu.memory_space<smem>>
    } else {
    }
    return
  }
  func.func @transform_0(%arg0: i32) -> (i32, i32) {
    %c0_i32 = arith.constant 0 : i32
    %c0_i32_0 = arith.constant 0 : i32
    %c0_i32_1 = arith.constant 0 : i32
    return %c0_i32, %c0_i32_0 : i32, i32
  }
  func.func @transform_1(%arg0: i32) -> (i32, i32) {
    %c0_i32 = arith.constant 0 : i32
    %c0_i32_0 = arith.constant 0 : i32
    %c0_i32_1 = arith.constant 0 : i32
    return %c0_i32, %c0_i32_0 : i32, i32
  }
  func.func @transform_2(%arg0: i32) -> (i32, i32) {
    %c0_i32 = arith.constant 0 : i32
    %c0_i32_0 = arith.constant 0 : i32
    %c0_i32_1 = arith.constant 0 : i32
    return %c0_i32, %c0_i32_0 : i32, i32
  }
  func.func @transform_3(%arg0: i32) -> (i32, i32) {
    %c0_i32 = arith.constant 0 : i32
    %c0_i32_0 = arith.constant 0 : i32
    return %arg0, %c0_i32 : i32, i32
  }
  func.func @transform_4(%arg0: i32) -> (i32, i32) {
    %c0_i32 = arith.constant 0 : i32
    %c0_i32_0 = arith.constant 0 : i32
    %c0_i32_1 = arith.constant 0 : i32
    return %c0_i32, %c0_i32_0 : i32, i32
  }
  func.func @transform_5(%arg0: i32) -> (i32, i32) {
    %c0_i32 = arith.constant 0 : i32
    %c0_i32_0 = arith.constant 0 : i32
    return %arg0, %c0_i32 : i32, i32
  }
  func.func @transform_6(%arg0: i32) -> (i32, i32) {
    %c0_i32 = arith.constant 0 : i32
    %c0_i32_0 = arith.constant 0 : i32
    %c0_i32_1 = arith.constant 0 : i32
    return %c0_i32, %c0_i32_0 : i32, i32
  }
}

</mosaic_0001>

<llo_original>
// kernel: tpu_custom_call.1
$region0: #{tpu_custom_call.1}
  #allocation0 [shape = 'u32[]', space=smem, size = 0x4, offset = 0x4, fixed_abs, tag = 'smem constant byte address 0x4 - core index']
  #allocation1 [shape = 'u32[144,128]{1,0:T(1,128)}', space=vmem, size = 0x12000, scoped, tag = 'internal scratch']
  #allocation2 [shape = 'f32[1,256]{1,0:T(1,128)}', space=vmem, size = 0x400, scoped, tag = 'scratch operand']
  #allocation3 [shape = 'f32[1,256]{1,0:T(1,128)}', space=vmem, size = 0x400, scoped, tag = 'scratch operand']
  #allocation4 [shape = 'f32[1,1]{1,0:T(1,128)}', space=smem, size = 0x200, scoped, tag = 'scratch operand']
  #allocation5 [shape = 'f32[1,1]{1,0:T(1,128)}', space=smem, size = 0x200, scoped, tag = 'scratch operand']
  #allocation6 [shape = 'f32[1,1]{1,0:T(1,128)}', space=smem, size = 0x200, scoped, tag = 'scratch operand']
  #allocation7 [shape = 'f32[1,1]{1,0:T(1,128)S(6)}', space=smem, size = 0x200, scoped, tag = 'scoped memory for tpu_custom_call.1']
  #allocation8 [shape = 'f32[1,1]{1,0:T(1,128)S(6)}', space=smem, size = 0x200, scoped, tag = 'scoped memory for tpu_custom_call.1']
  #allocation9 [shape = 'f32[1,1]{1,0:T(1,128)S(6)}', space=smem, size = 0x200, scoped, tag = 'scoped memory for tpu_custom_call.1']
  %s0 = inlined_call_operand.<no memory space> [shape: f32[1,1], index: 0, kind: input, shape index: {}]
  %s1 = inlined_call_operand.<no memory space> [shape: f32[1,1], index: 1, kind: input, shape index: {}]
  %s2 = inlined_call_operand.<no memory space> [shape: f32[1,1], index: 2, kind: input, shape index: {}]
  %s3 = inlined_call_operand.vmem [shape: bf16[256,64], index: 3, kind: input, shape index: {}]
  %s4 = inlined_call_operand.vmem [shape: bf16[256,64], index: 4, kind: input, shape index: {}]
  %s5 = inlined_call_operand.vmem [shape: bf16[256,64], index: 5, kind: input, shape index: {}]
  %s6 = inlined_call_operand.hbm [shape: f32[1,1], index: 6, kind: output, shape index: {}]
  %s7 = sld [smem:[#allocation0]]
  $region65: #{tpu_custom_call.1} parent=0
    _
  %s9 = ssub.s32 1, %s7
  %s10 = scalar_select 0, %s9, %s7
  %11 = sst [smem:[#allocation7]] %s0
  %12 = sst [smem:[#allocation8]] %s1
  %13 = sst [smem:[#allocation9]] %s2
  $region1: #{tpu_custom_call.1} parent=0
    #allocation10 [shape = 'u8[512]{0}', space=smem, size = 0x200, scoped, tag = 'output window, operand 0, single buffered']
    #allocation11 [shape = 's32[2]{0}', space=sflag, size = 0x8, scoped, tag = 'scoped memory for tpu_custom_call.1']
    %14 = vsyncpa [#allocation11], 0
    loop: start=0, step=1, limit=4
    $region2: #{tpu_custom_call.1} parent=1 // loop_pre_header
      _
    $region3: #{tpu_custom_call.1} parent=1 // loop_header
      %s16 = sphi 0, %s20
      %p17 = scmp.ge.s32.totalorder %s16, 4
      %s24 = sphi 0, %s24
      %s26 = sphi 0, %s24
      %s27 = sphi 0, %s26
      %s41 = sphi 0, %s27
      %s45 = sphi 0, %s45
      %s47 = sphi 0, %s45
      %s48 = sphi 0, %s47
      %s62 = sphi 0, %s48
      %s66 = sphi 0, %s66
      %s68 = sphi 0, %s66
      %s69 = sphi 0, %s68
      %s83 = sphi 0, %s69
      %s89 = sphi 0, %s91
      %s92 = sphi 0, %s89
      %s93 = sphi 0, %s92
      %s109 = sphi 0, %s93
      %s113 = sphi 0, %s113
      %s115 = sphi 0, %s113
      %s116 = sphi 0, %s115
      %s130 = sphi 0, %s116
      %s136 = sphi 0, %s138
      %s139 = sphi 0, %s136
      %s140 = sphi 0, %s139
      %s156 = sphi 0, %s140
      %s160 = sphi 0, %s160
      %s162 = sphi 0, %s160
      %s163 = sphi 0, %s162
      %s177 = sphi 0, %s163
    $region4: #{tpu_custom_call.1} parent=1 // loop_header_branch
      %19 = sbr.rel (%p17) target = $region8
    $region5: #{tpu_custom_call.1} parent=1 // loop_body
      %s21 = ssub.s32 %s16, 1
      %s22 = ssub.s32 %s16, 2
      %s23 = sadd.s32 %s16, 1
      %s25 = sadd.s32 %s24, 1
      %p28 = scmp.eq.s32.totalorder %s16, 1
      %p29 = scmp.ne.s32.totalorder %s24, %s26
      %p30 = scmp.eq.s32.totalorder %s16, 0
      %p31 = por %p29, %p30
      %p32 = scmp.ne.s32.totalorder %s24, %s26
      %p33 = scmp.eq.s32.totalorder %s21, 1
      %p34 = por %p32, %p33
      %p35 = scmp.ne.s32.totalorder %s26, %s27
      %p36 = scmp.eq.s32.totalorder %s21, 0
      %p37 = por %p35, %p36
      %p38 = scmp.ne.s32.totalorder %s26, %s27
      %p39 = scmp.eq.s32.totalorder %s22, 1
      %p40 = por %p38, %p39
      %p42 = scmp.ne.s32.totalorder %s27, %s41
      %p43 = scmp.eq.s32.totalorder %s22, 0
      %p44 = por %p42, %p43
      %s46 = sadd.s32 %s45, 1
      %p49 = scmp.eq.s32.totalorder %s16, 1
      %p50 = scmp.ne.s32.totalorder %s45, %s47
      %p51 = scmp.eq.s32.totalorder %s16, 0
      %p52 = por %p50, %p51
      %p53 = scmp.ne.s32.totalorder %s45, %s47
      %p54 = scmp.eq.s32.totalorder %s21, 1
      %p55 = por %p53, %p54
      %p56 = scmp.ne.s32.totalorder %s47, %s48
      %p57 = scmp.eq.s32.totalorder %s21, 0
      %p58 = por %p56, %p57
      %p59 = scmp.ne.s32.totalorder %s47, %s48
      %p60 = scmp.eq.s32.totalorder %s22, 1
      %p61 = por %p59, %p60
      %p63 = scmp.ne.s32.totalorder %s48, %s62
      %p64 = scmp.eq.s32.totalorder %s22, 0
      %p65 = por %p63, %p64
      %s67 = sadd.s32 %s66, 1
      %p70 = scmp.eq.s32.totalorder %s16, 1
      %p71 = scmp.ne.s32.totalorder %s66, %s68
      %p72 = scmp.eq.s32.totalorder %s16, 0
      %p73 = por %p71, %p72
      %p74 = scmp.ne.s32.totalorder %s66, %s68
      %p75 = scmp.eq.s32.totalorder %s21, 1
      %p76 = por %p74, %p75
      %p77 = scmp.ne.s32.totalorder %s68, %s69
      %p78 = scmp.eq.s32.totalorder %s21, 0
      %p79 = por %p77, %p78
      %p80 = scmp.ne.s32.totalorder %s68, %s69
      %p81 = scmp.eq.s32.totalorder %s22, 1
      %p82 = por %p80, %p81
      %p84 = scmp.ne.s32.totalorder %s69, %s83
      %p85 = scmp.eq.s32.totalorder %s22, 0
      %p86 = por %p84, %p85
      %s87 = ssub.s32 %s16, %s23
      %p88 = scmp.eq.s32.totalorder %s87, 0
      %s90 = sadd.s32 %s89, 1
      %s91 = scalar_select %p88, %s89, %s90
      %p94 = pneg %p88
      %p95 = scmp.eq.s32.totalorder %s16, 1
      %p96 = por %p94, %p95
      %p97 = scmp.ne.s32.totalorder %s89, %s92
      %p98 = scmp.eq.s32.totalorder %s16, 0
      %p99 = por %p97, %p98
      %p100 = scmp.ne.s32.totalorder %s89, %s92
      %p101 = scmp.eq.s32.totalorder %s21, 1
      %p102 = por %p100, %p101
      %p103 = scmp.ne.s32.totalorder %s92, %s93
      %p104 = scmp.eq.s32.totalorder %s21, 0
      %p105 = por %p103, %p104
      %p106 = scmp.ne.s32.totalorder %s92, %s93
      %p107 = scmp.eq.s32.totalorder %s22, 1
      %p108 = por %p106, %p107
      %p110 = scmp.ne.s32.totalorder %s93, %s109
      %p111 = scmp.eq.s32.totalorder %s22, 0
      %p112 = por %p110, %p111
      %s114 = sadd.s32 %s113, 1
      %p117 = scmp.eq.s32.totalorder %s16, 1
      %p118 = scmp.ne.s32.totalorder %s113, %s115
      %p119 = scmp.eq.s32.totalorder %s16, 0
      %p120 = por %p118, %p119
      %p121 = scmp.ne.s32.totalorder %s113, %s115
      %p122 = scmp.eq.s32.totalorder %s21, 1
      %p123 = por %p121, %p122
      %p124 = scmp.ne.s32.totalorder %s115, %s116
      %p125 = scmp.eq.s32.totalorder %s21, 0
      %p126 = por %p124, %p125
      %p127 = scmp.ne.s32.totalorder %s115, %s116
      %p128 = scmp.eq.s32.totalorder %s22, 1
      %p129 = por %p127, %p128
      %p131 = scmp.ne.s32.totalorder %s116, %s130
      %p132 = scmp.eq.s32.totalorder %s22, 0
      %p133 = por %p131, %p132
      %s134 = ssub.s32 %s16, %s23
      %p135 = scmp.eq.s32.totalorder %s134, 0
      %s137 = sadd.s32 %s136, 1
      %s138 = scalar_select %p135, %s136, %s137
      %p141 = pneg %p135
      %p142 = scmp.eq.s32.totalorder %s16, 1
      %p143 = por %p141, %p142
      %p144 = scmp.ne.s32.totalorder %s136, %s139
      %p145 = scmp.eq.s32.totalorder %s16, 0
      %p146 = por %p144, %p145
      %p147 = scmp.ne.s32.totalorder %s136, %s139
      %p148 = scmp.eq.s32.totalorder %s21, 1
      %p149 = por %p147, %p148
      %p150 = scmp.ne.s32.totalorder %s139, %s140
      %p151 = scmp.eq.s32.totalorder %s21, 0
      %p152 = por %p150, %p151
      %p153 = scmp.ne.s32.totalorder %s139, %s140
      %p154 = scmp.eq.s32.totalorder %s22, 1
      %p155 = por %p153, %p154
      %p157 = scmp.ne.s32.totalorder %s140, %s156
      %p158 = scmp.eq.s32.totalorder %s22, 0
      %p159 = por %p157, %p158
      %s161 = sadd.s32 %s160, 1
      %p164 = scmp.eq.s32.totalorder %s16, 1
      %p165 = scmp.ne.s32.totalorder %s160, %s162
      %p166 = scmp.eq.s32.totalorder %s16, 0
      %p167 = por %p165, %p166
      %p168 = scmp.ne.s32.totalorder %s160, %s162
      %p169 = scmp.eq.s32.totalorder %s21, 1
      %p170 = por %p168, %p169
      %p171 = scmp.ne.s32.totalorder %s162, %s163
      %p172 = scmp.eq.s32.totalorder %s21, 0
      %p173 = por %p171, %p172
      %p174 = scmp.ne.s32.totalorder %s162, %s163
      %p175 = scmp.eq.s32.totalorder %s22, 1
      %p176 = por %p174, %p175
      %p178 = scmp.ne.s32.totalorder %s163, %s177
      %p179 = scmp.eq.s32.totalorder %s22, 0
      %p180 = por %p178, %p179
      %p181 = scmp.le.s32.totalorder 1, %s16
      %p182 = scmp.lt.s32.totalorder %s16, 3
      %p183 = pnand %p181, %p182
      %p184 = pneg %p183
      // Predicated region
      $region9: #{tpu_custom_call.1} parent=5 // pred_check
        _
      $region10: #{tpu_custom_call.1} parent=5 // pred_check_branch
        %186 = sbr.rel (%p183) target = $region12
      $region11: #{tpu_custom_call.1} parent=5 // pred_region
        %s187 = ssub.s32 %s16, 1
        // Predicated region
        $region13: #{tpu_custom_call.1} parent=11 // pred_check
          %p188 = pneg %p37
        $region14: #{tpu_custom_call.1} parent=11 // pred_check_branch
          %190 = sbr.rel (%p188) target = $region16
        $region15: #{tpu_custom_call.1} parent=11 // pred_region
          _
        $region16: #{tpu_custom_call.1} parent=11 // pred_fallthru
          _
        // Predicated region
        $region17: #{tpu_custom_call.1} parent=11 // pred_check
          %p191 = pneg %p58
        $region18: #{tpu_custom_call.1} parent=11 // pred_check_branch
          %193 = sbr.rel (%p191) target = $region20
        $region19: #{tpu_custom_call.1} parent=11 // pred_region
          _
        $region20: #{tpu_custom_call.1} parent=11 // pred_fallthru
          _
        // Predicated region
        $region21: #{tpu_custom_call.1} parent=11 // pred_check
          %p194 = pneg %p79
        $region22: #{tpu_custom_call.1} parent=11 // pred_check_branch
          %196 = sbr.rel (%p194) target = $region24
        $region23: #{tpu_custom_call.1} parent=11 // pred_region
          _
        $region24: #{tpu_custom_call.1} parent=11 // pred_fallthru
          _
        // Predicated region
        $region25: #{tpu_custom_call.1} parent=11 // pred_check
          %p197 = pneg %p126
        $region26: #{tpu_custom_call.1} parent=11 // pred_check_branch
          %199 = sbr.rel (%p197) target = $region28
        $region27: #{tpu_custom_call.1} parent=11 // pred_region
          _
        $region28: #{tpu_custom_call.1} parent=11 // pred_fallthru
          _
      $region12: #{tpu_custom_call.1} parent=5 // pred_fallthru
        _
      %p200 = scmp.lt.s32.totalorder %s16, 2
      // Predicated region
      $region29: #{tpu_custom_call.1} parent=5 // pred_check
        %p201 = pneg %p200
      $region30: #{tpu_custom_call.1} parent=5 // pred_check_branch
        %203 = sbr.rel (%p201) target = $region32
      $region31: #{tpu_custom_call.1} parent=5 // pred_region
        // Predicated region
        $region33: #{tpu_custom_call.1} parent=31 // pred_check
          %p204 = pneg %p99
        $region34: #{tpu_custom_call.1} parent=31 // pred_check_branch
          %206 = sbr.rel (%p204) target = $region36
        $region35: #{tpu_custom_call.1} parent=31 // pred_region
          %s207 = smul.u32 16, %s16
          %p208 = scmp.lt.s32.totalorder %s207, 31
          %s209 = scalar_select %p208, %s207, 31
          %s210 = smul.addr %s209, 4
          %s211 = scalar_lea.vmem %s3, %s210
          %s212 = smul.u32 16, %s16
        $region36: #{tpu_custom_call.1} parent=31 // pred_fallthru
          _
        // Predicated region
        $region37: #{tpu_custom_call.1} parent=31 // pred_check
          %p213 = pneg %p146
        $region38: #{tpu_custom_call.1} parent=31 // pred_check_branch
          %215 = sbr.rel (%p213) target = $region40
        $region39: #{tpu_custom_call.1} parent=31 // pred_region
          %s216 = smul.u32 16, %s16
          %p217 = scmp.lt.s32.totalorder %s216, 31
          %s218 = scalar_select %p217, %s216, 31
          %s219 = smul.addr %s218, 4
          %s220 = scalar_lea.vmem %s5, %s219
          %s221 = smul.u32 16, %s16
        $region40: #{tpu_custom_call.1} parent=31 // pred_fallthru
          _
      $region32: #{tpu_custom_call.1} parent=5 // pred_fallthru
        _
      %p222 = scmp.le.s32.totalorder 1, %s16
      %p223 = scmp.lt.s32.totalorder %s16, 3
      %p224 = pnand %p222, %p223
      %p225 = pneg %p224
      // Predicated region
      $region41: #{tpu_custom_call.1} parent=5 // pred_check
        _
      $region42: #{tpu_custom_call.1} parent=5 // pred_check_branch
        %227 = sbr.rel (%p224) target = $region44
      $region43: #{tpu_custom_call.1} parent=5 // pred_region
        %s228 = ssub.s32 %s16, 1
        %p229 = pneg %p37
        %p230 = pneg %p34
        %p231 = pneg %p58
        %p232 = pneg %p55
        %p233 = pneg %p79
        %p234 = pneg %p76
        %s235 = smul.u32 16, %s21
        %p236 = scmp.lt.s32.totalorder %s235, 31
        %s237 = scalar_select %p236, %s235, 31
        %s238 = smul.addr %s237, 4
        %s239 = scalar_lea.vmem %s3, %s238
        %p240 = pneg %p105
        %p241 = pneg %p102
        %p242 = pneg %p126
        %p243 = pneg %p123
        %s244 = smul.u32 16, %s21
        %p245 = scmp.lt.s32.totalorder %s244, 31
        %s246 = scalar_select %p245, %s244, 31
        %s247 = smul.addr %s246, 4
        %s248 = scalar_lea.vmem %s5, %s247
        %p249 = pneg %p152
        %p250 = pneg %p149
        %p251 = pneg %p173
        %p252 = pneg %p170
        %s253 = smul.u32 16, %s21
        %p254 = scmp.lt.s32.totalorder %s253, 31
        %s255 = scalar_select %p254, %s253, 31
        %s256 = smul.addr %s255, 4
        %s257 = scalar_lea.vmem %s3, %s256
        %s258 = smul.u32 16, %s21
        %s259 = smul.u32 16, %s21
        %p260 = scmp.lt.s32.totalorder %s259, 31
        %s261 = scalar_select %p260, %s259, 31
        %s262 = smul.addr %s261, 4
        %s263 = scalar_lea.vmem %s5, %s262
        %s264 = smul.u32 16, %s21
        %p266 = scmp.eq.s32.totalorder %s21, 0
        // Predicated region
        $region45: #{tpu_custom_call.1} parent=43 // pred_check
          %p267 = pneg %p266
        $region46: #{tpu_custom_call.1} parent=43 // pred_check_branch
          %269 = sbr.rel (%p267) target = $region48
        $region47: #{tpu_custom_call.1} parent=43 // pred_region
          %v270 = vlaneseq
          %vm271 = vcmp.ge.s32.totalorder %v270, 0
          %vm272 = vcmp.lt.s32.totalorder %v270, 256
          %vm273 = vmand %vm271, %vm272
          %274 = vst.msk [vmem:[#allocation2] sm:$0x3] %vm273, -inf
          %275 = vst.msk [vmem:[#allocation3] sm:$0x3] %vm273, 0.0
          %s276 = scalar_lea.smem [#allocation4], 0
          %277 = sst [smem:[%s276]] 0.0
          %s278 = scalar_lea.smem [#allocation5], 0
          %279 = sst [smem:[%s278]] 0.0
          %s280 = scalar_lea.smem [#allocation6], 0
          %281 = sst [smem:[%s280]] 0.0
        $region48: #{tpu_custom_call.1} parent=43 // pred_fallthru
          _
        %s282 = sld [smem:[#allocation7]]
        %v283 = vld [vmem:[%s257] sm:$0xf]
        %v284 = vld [vmem:[%s257 + $0x4] sm:$0xf]
        %v285 = vld [vmem:[%s257 + $0x8] sm:$0xf]
        %v286 = vld [vmem:[%s257 + $0xc] sm:$0xf]
        %v287 = vld [vmem:[%s257 + $0x10] sm:$0xf]
        %v288 = vld [vmem:[%s257 + $0x14] sm:$0xf]
        %v289 = vld [vmem:[%s257 + $0x18] sm:$0xf]
        %v290 = vld [vmem:[%s257 + $0x1c] sm:$0xf]
        %v291 = vld [vmem:[%s257 + $0x20] sm:$0xf]
        %v292 = vld [vmem:[%s257 + $0x24] sm:$0xf]
        %v293 = vld [vmem:[%s257 + $0x28] sm:$0xf]
        %v294 = vld [vmem:[%s257 + $0x2c] sm:$0xf]
        %v295 = vld [vmem:[%s257 + $0x30] sm:$0xf]
        %v296 = vld [vmem:[%s257 + $0x34] sm:$0xf]
        %v297 = vld [vmem:[%s257 + $0x38] sm:$0xf]
        %v298 = vld [vmem:[%s257 + $0x3c] sm:$0xf]
        %v299 = vld [vmem:[%s4] sm:$0xf]
        %v300 = vld [vmem:[%s4 + $0x4] sm:$0xf]
        %v301 = vld [vmem:[%s4 + $0x8] sm:$0xf]
        %v302 = vld [vmem:[%s4 + $0xc] sm:$0xf]
        %v303 = vld [vmem:[%s4 + $0x10] sm:$0xf]
        %v304 = vld [vmem:[%s4 + $0x14] sm:$0xf]
        %v305 = vld [vmem:[%s4 + $0x18] sm:$0xf]
        %v306 = vld [vmem:[%s4 + $0x1c] sm:$0xf]
        %v307 = vld [vmem:[%s4 + $0x20] sm:$0xf]
        %v308 = vld [vmem:[%s4 + $0x24] sm:$0xf]
        %v309 = vld [vmem:[%s4 + $0x28] sm:$0xf]
        %v310 = vld [vmem:[%s4 + $0x2c] sm:$0xf]
        %v311 = vld [vmem:[%s4 + $0x30] sm:$0xf]
        %v312 = vld [vmem:[%s4 + $0x34] sm:$0xf]
        %v313 = vld [vmem:[%s4 + $0x38] sm:$0xf]
        %v314 = vld [vmem:[%s4 + $0x3c] sm:$0xf]
        %v315 = vld [vmem:[%s4 + $0x40] sm:$0xf]
        %v316 = vld [vmem:[%s4 + $0x44] sm:$0xf]
        %v317 = vld [vmem:[%s4 + $0x48] sm:$0xf]
        %v318 = vld [vmem:[%s4 + $0x4c] sm:$0xf]
        %v319 = vld [vmem:[%s4 + $0x50] sm:$0xf]
        %v320 = vld [vmem:[%s4 + $0x54] sm:$0xf]
        %v321 = vld [vmem:[%s4 + $0x58] sm:$0xf]
        %v322 = vld [vmem:[%s4 + $0x5c] sm:$0xf]
        %v323 = vld [vmem:[%s4 + $0x60] sm:$0xf]
        %v324 = vld [vmem:[%s4 + $0x64] sm:$0xf]
        %v325 = vld [vmem:[%s4 + $0x68] sm:$0xf]
        %v326 = vld [vmem:[%s4 + $0x6c] sm:$0xf]
        %v327 = vld [vmem:[%s4 + $0x70] sm:$0xf]
        %v328 = vld [vmem:[%s4 + $0x74] sm:$0xf]
        %v329 = vld [vmem:[%s4 + $0x78] sm:$0xf]
        %v330 = vld [vmem:[%s4 + $0x7c] sm:$0xf]
        %v347 = vunpack.c.l.b16 %v283
        %v348 = vunpack.c.l.b16 %v284
        %v349 = vunpack.c.l.b16 %v285
        %v350 = vunpack.c.l.b16 %v286
        %v351 = vunpack.c.l.b16 %v287
        %v352 = vunpack.c.l.b16 %v288
        %v353 = vunpack.c.l.b16 %v289
        %v354 = vunpack.c.l.b16 %v290
        %v355 = vunpack.c.l.b16 %v291
        %v356 = vunpack.c.l.b16 %v292
        %v357 = vunpack.c.l.b16 %v293
        %v358 = vunpack.c.l.b16 %v294
        %v359 = vunpack.c.l.b16 %v295
        %v360 = vunpack.c.l.b16 %v296
        %v361 = vunpack.c.l.b16 %v297
        %v362 = vunpack.c.l.b16 %v298
        %v363 = vpack.c.b16 %v348, %v347
        %v364 = vpack.c.b16 %v350, %v349
        %v365 = vpack.c.b16 %v352, %v351
        %v366 = vpack.c.b16 %v354, %v353
        %v367 = vpack.c.b16 %v356, %v355
        %v368 = vpack.c.b16 %v358, %v357
        %v369 = vpack.c.b16 %v360, %v359
        %v370 = vpack.c.b16 %v362, %v361
        %v403 = vunpack.c.l.b16 %v299
        %v404 = vunpack.c.l.b16 %v300
        %v405 = vunpack.c.l.b16 %v301
        %v406 = vunpack.c.l.b16 %v302
        %v407 = vunpack.c.l.b16 %v303
        %v408 = vunpack.c.l.b16 %v304
        %v409 = vunpack.c.l.b16 %v305
        %v410 = vunpack.c.l.b16 %v306
        %v411 = vunpack.c.l.b16 %v307
        %v412 = vunpack.c.l.b16 %v308
        %v413 = vunpack.c.l.b16 %v309
        %v414 = vunpack.c.l.b16 %v310
        %v415 = vunpack.c.l.b16 %v311
        %v416 = vunpack.c.l.b16 %v312
        %v417 = vunpack.c.l.b16 %v313
        %v418 = vunpack.c.l.b16 %v314
        %v419 = vunpack.c.l.b16 %v315
        %v420 = vunpack.c.l.b16 %v316
        %v421 = vunpack.c.l.b16 %v317
        %v422 = vunpack.c.l.b16 %v318
        %v423 = vunpack.c.l.b16 %v319
        %v424 = vunpack.c.l.b16 %v320
        %v425 = vunpack.c.l.b16 %v321
        %v426 = vunpack.c.l.b16 %v322
        %v427 = vunpack.c.l.b16 %v323
        %v428 = vunpack.c.l.b16 %v324
        %v429 = vunpack.c.l.b16 %v325
        %v430 = vunpack.c.l.b16 %v326
        %v431 = vunpack.c.l.b16 %v327
        %v432 = vunpack.c.l.b16 %v328
        %v433 = vunpack.c.l.b16 %v329
        %v434 = vunpack.c.l.b16 %v330
        %v435 = vpack.c.b16 %v404, %v403
        %v436 = vpack.c.b16 %v406, %v405
        %v437 = vpack.c.b16 %v408, %v407
        %v438 = vpack.c.b16 %v410, %v409
        %v439 = vpack.c.b16 %v412, %v411
        %v440 = vpack.c.b16 %v414, %v413
        %v441 = vpack.c.b16 %v416, %v415
        %v442 = vpack.c.b16 %v418, %v417
        %v443 = vpack.c.b16 %v420, %v419
        %v444 = vpack.c.b16 %v422, %v421
        %v445 = vpack.c.b16 %v424, %v423
        %v446 = vpack.c.b16 %v426, %v425
        %v447 = vpack.c.b16 %v428, %v427
        %v448 = vpack.c.b16 %v430, %v429
        %v449 = vpack.c.b16 %v432, %v431
        %v450 = vpack.c.b16 %v434, %v433
        %vm451 = vcmask 523264
        %v453 = vsel %vm451, %v363, 0
        %v456 = vsel %vm451, %v364, 0
        %v459 = vsel %vm451, %v365, 0
        %v462 = vsel %vm451, %v366, 0
        %v465 = vsel %vm451, %v367, 0
        %v468 = vsel %vm451, %v368, 0
        %v471 = vsel %vm451, %v369, 0
        %v474 = vsel %vm451, %v370, 0
        %v477 = vsel %vm451, %v435, 0
        %v480 = vsel %vm451, %v436, 0
        %v483 = vsel %vm451, %v437, 0
        %v486 = vsel %vm451, %v438, 0
        %v489 = vsel %vm451, %v439, 0
        %v492 = vsel %vm451, %v440, 0
        %v495 = vsel %vm451, %v441, 0
        %v498 = vsel %vm451, %v442, 0
        %v501 = vsel %vm451, %v443, 0
        %v504 = vsel %vm451, %v444, 0
        %v507 = vsel %vm451, %v445, 0
        %v510 = vsel %vm451, %v446, 0
        %v513 = vsel %vm451, %v447, 0
        %v516 = vsel %vm451, %v448, 0
        %v519 = vsel %vm451, %v449, 0
        %v522 = vsel %vm451, %v450, 0
        %524 = vmatprep.subr.bf16.mxu0 0
        %525 = vmatpush1.bf16.xpose.msra.mxu0 %v477
        %526 = vmatprep.subr.bf16.mxu0 0
        %527 = vmatpush1.bf16.xpose.msra.mxu0 %v480
        %528 = vmatprep.subr.bf16.mxu0 0
        %529 = vmatpush1.bf16.xpose.msra.mxu0 %v483
        %530 = vmatprep.subr.bf16.mxu0 0
        %531 = vmatpush1.bf16.xpose.msra.mxu0 %v486
        %532 = vmatprep.subr.bf16.mxu0 0
        %533 = vmatpush1.bf16.xpose.msra.mxu0 %v489
        %534 = vmatprep.subr.bf16.mxu0 0
        %535 = vmatpush1.bf16.xpose.msra.mxu0 %v492
        %536 = vmatprep.subr.bf16.mxu0 0
        %537 = vmatpush1.bf16.xpose.msra.mxu0 %v495
        %538 = vmatprep.subr.bf16.mxu0 0
        %539 = vmatpush1.bf16.xpose.msra.mxu0 %v498
        %540 = vmatprep.subr.bf16.mxu0 0
        %541 = vmatpush1.bf16.xpose.msra.mxu0 %v501
        %542 = vmatprep.subr.bf16.mxu0 0
        %543 = vmatpush1.bf16.xpose.msra.mxu0 %v504
        %544 = vmatprep.subr.bf16.mxu0 0
        %545 = vmatpush1.bf16.xpose.msra.mxu0 %v507
        %546 = vmatprep.subr.bf16.mxu0 0
        %547 = vmatpush1.bf16.xpose.msra.mxu0 %v510
        %548 = vmatprep.subr.bf16.mxu0 0
        %549 = vmatpush1.bf16.xpose.msra.mxu0 %v513
        %550 = vmatprep.subr.bf16.mxu0 0
        %551 = vmatpush1.bf16.xpose.msra.mxu0 %v516
        %552 = vmatprep.subr.bf16.mxu0 0
        %553 = vmatpush1.bf16.xpose.msra.mxu0 %v519
        %554 = vmatprep.subr.bf16.mxu0 0
        %555 = vmatpush1.bf16.xpose.msra.mxu0 %v522
        %556 = vmatprep.mubr.bf16.mxu0 0
        %557 = vmatmul.mubr.bf16.gmra.mrb[0].mxu0 %v453
        %v558 = vpop.f32.mrb[0].mxu0
        %v559 = vadd.f32 0.0, %v558
        %v560 = vpop.f32.mrb[0].mxu0
        %v561 = vadd.f32 0.0, %v560
        %v562 = vpop.f32.mrb[0].mxu0
        %v563 = vadd.f32 0.0, %v562
        %v564 = vpop.f32.mrb[0].mxu0
        %v565 = vadd.f32 0.0, %v564
        %566 = vmatprep.mubr.bf16.mxu0 0
        %567 = vmatmul.mubr.bf16.gmra.mrb[0].mxu0 %v456
        %v568 = vpop.f32.mrb[0].mxu0
        %v569 = vadd.f32 0.0, %v568
        %v570 = vpop.f32.mrb[0].mxu0
        %v571 = vadd.f32 0.0, %v570
        %v572 = vpop.f32.mrb[0].mxu0
        %v573 = vadd.f32 0.0, %v572
        %v574 = vpop.f32.mrb[0].mxu0
        %v575 = vadd.f32 0.0, %v574
        %576 = vmatprep.mubr.bf16.mxu0 0
        %577 = vmatmul.mubr.bf16.gmra.mrb[0].mxu0 %v459
        %v578 = vpop.f32.mrb[0].mxu0
        %v579 = vadd.f32 0.0, %v578
        %v580 = vpop.f32.mrb[0].mxu0
        %v581 = vadd.f32 0.0, %v580
        %v582 = vpop.f32.mrb[0].mxu0
        %v583 = vadd.f32 0.0, %v582
        %v584 = vpop.f32.mrb[0].mxu0
        %v585 = vadd.f32 0.0, %v584
        %586 = vmatprep.mubr.bf16.mxu0 0
        %587 = vmatmul.mubr.bf16.gmra.mrb[0].mxu0 %v462
        %v588 = vpop.f32.mrb[0].mxu0
        %v589 = vadd.f32 0.0, %v588
        %v590 = vpop.f32.mrb[0].mxu0
        %v591 = vadd.f32 0.0, %v590
        %v592 = vpop.f32.mrb[0].mxu0
        %v593 = vadd.f32 0.0, %v592
        %v594 = vpop.f32.mrb[0].mxu0
        %v595 = vadd.f32 0.0, %v594
        %596 = vmatprep.mubr.bf16.mxu0 0
        %597 = vmatmul.mubr.bf16.gmra.mrb[0].mxu0 %v465
        %v598 = vpop.f32.mrb[0].mxu0
        %v599 = vadd.f32 0.0, %v598
        %v600 = vpop.f32.mrb[0].mxu0
        %v601 = vadd.f32 0.0, %v600
        %v602 = vpop.f32.mrb[0].mxu0
        %v603 = vadd.f32 0.0, %v602
        %v604 = vpop.f32.mrb[0].mxu0
        %v605 = vadd.f32 0.0, %v604
        %606 = vmatprep.mubr.bf16.mxu0 0
        %607 = vmatmul.mubr.bf16.gmra.mrb[0].mxu0 %v468
        %v608 = vpop.f32.mrb[0].mxu0
        %v609 = vadd.f32 0.0, %v608
        %v610 = vpop.f32.mrb[0].mxu0
        %v611 = vadd.f32 0.0, %v610
        %v612 = vpop.f32.mrb[0].mxu0
        %v613 = vadd.f32 0.0, %v612
        %v614 = vpop.f32.mrb[0].mxu0
        %v615 = vadd.f32 0.0, %v614
        %616 = vmatprep.mubr.bf16.mxu0 0
        %617 = vmatmul.mubr.bf16.gmra.mrb[0].mxu0 %v471
        %v618 = vpop.f32.mrb[0].mxu0
        %v619 = vadd.f32 0.0, %v618
        %v620 = vpop.f32.mrb[0].mxu0
        %v621 = vadd.f32 0.0, %v620
        %v622 = vpop.f32.mrb[0].mxu0
        %v623 = vadd.f32 0.0, %v622
        %v624 = vpop.f32.mrb[0].mxu0
        %v625 = vadd.f32 0.0, %v624
        %626 = vmatprep.mubr.bf16.mxu0 0
        %627 = vmatmul.mubr.bf16.gmra.mrb[0].mxu0 %v474
        %v628 = vpop.f32.mrb[0].mxu0
        %v629 = vadd.f32 0.0, %v628
        %v630 = vpop.f32.mrb[0].mxu0
        %v631 = vadd.f32 0.0, %v630
        %v632 = vpop.f32.mrb[0].mxu0
        %v633 = vadd.f32 0.0, %v632
        %v634 = vpop.f32.mrb[0].mxu0
        %v635 = vadd.f32 0.0, %v634
        %636 = vdwg.mxu0
        %v637 = vstv %s282
        %v638 = vmul.f32 %v637, %v559
        %v639 = vmul.f32 %v637, %v561
        %v640 = vmul.f32 %v637, %v563
        %v641 = vmul.f32 %v637, %v565
        %v642 = vmul.f32 %v637, %v569
        %v643 = vmul.f32 %v637, %v571
        %v644 = vmul.f32 %v637, %v573
        %v645 = vmul.f32 %v637, %v575
        %v646 = vmul.f32 %v637, %v579
        %v647 = vmul.f32 %v637, %v581
        %v648 = vmul.f32 %v637, %v583
        %v649 = vmul.f32 %v637, %v585
        %v650 = vmul.f32 %v637, %v589
        %v651 = vmul.f32 %v637, %v591
        %v652 = vmul.f32 %v637, %v593
        %v653 = vmul.f32 %v637, %v595
        %v654 = vmul.f32 %v637, %v599
        %v655 = vmul.f32 %v637, %v601
        %v656 = vmul.f32 %v637, %v603
        %v657 = vmul.f32 %v637, %v605
        %v658 = vmul.f32 %v637, %v609
        %v659 = vmul.f32 %v637, %v611
        %v660 = vmul.f32 %v637, %v613
        %v661 = vmul.f32 %v637, %v615
        %v662 = vmul.f32 %v637, %v619
        %v663 = vmul.f32 %v637, %v621
        %v664 = vmul.f32 %v637, %v623
        %v665 = vmul.f32 %v637, %v625
        %v666 = vmul.f32 %v637, %v629
        %v667 = vmul.f32 %v637, %v631
        %v668 = vmul.f32 %v637, %v633
        %v669 = vmul.f32 %v637, %v635
        %v670 = vunpack.c.l.bf16 %v283
        %v671 = vunpack.c.l.bf16 %v284
        %v672 = vunpack.c.l.bf16 %v285
        %v673 = vunpack.c.l.bf16 %v286
        %v674 = vunpack.c.l.bf16 %v287
        %v675 = vunpack.c.l.bf16 %v288
        %v676 = vunpack.c.l.bf16 %v289
        %v677 = vunpack.c.l.bf16 %v290
        %v678 = vunpack.c.l.bf16 %v291
        %v679 = vunpack.c.l.bf16 %v292
        %v680 = vunpack.c.l.bf16 %v293
        %v681 = vunpack.c.l.bf16 %v294
        %v682 = vunpack.c.l.bf16 %v295
        %v683 = vunpack.c.l.bf16 %v296
        %v684 = vunpack.c.l.bf16 %v297
        %v685 = vunpack.c.l.bf16 %v298
        %v686 = vld [vmem:[%s263] sm:$0xf]
        %v687 = vld [vmem:[%s263 + $0x4] sm:$0xf]
        %v688 = vld [vmem:[%s263 + $0x8] sm:$0xf]
        %v689 = vld [vmem:[%s263 + $0xc] sm:$0xf]
        %v690 = vld [vmem:[%s263 + $0x10] sm:$0xf]
        %v691 = vld [vmem:[%s263 + $0x14] sm:$0xf]
        %v692 = vld [vmem:[%s263 + $0x18] sm:$0xf]
        %v693 = vld [vmem:[%s263 + $0x1c] sm:$0xf]
        %v694 = vld [vmem:[%s263 + $0x20] sm:$0xf]
        %v695 = vld [vmem:[%s263 + $0x24] sm:$0xf]
        %v696 = vld [vmem:[%s263 + $0x28] sm:$0xf]
        %v697 = vld [vmem:[%s263 + $0x2c] sm:$0xf]
        %v698 = vld [vmem:[%s263 + $0x30] sm:$0xf]
        %v699 = vld [vmem:[%s263 + $0x34] sm:$0xf]
        %v700 = vld [vmem:[%s263 + $0x38] sm:$0xf]
        %v701 = vld [vmem:[%s263 + $0x3c] sm:$0xf]
        %v702 = vunpack.c.l.bf16 %v686
        %v703 = vunpack.c.l.bf16 %v687
        %v704 = vunpack.c.l.bf16 %v688
        %v705 = vunpack.c.l.bf16 %v689
        %v706 = vunpack.c.l.bf16 %v690
        %v707 = vunpack.c.l.bf16 %v691
        %v708 = vunpack.c.l.bf16 %v692
        %v709 = vunpack.c.l.bf16 %v693
        %v710 = vunpack.c.l.bf16 %v694
        %v711 = vunpack.c.l.bf16 %v695
        %v712 = vunpack.c.l.bf16 %v696
        %v713 = vunpack.c.l.bf16 %v697
        %v714 = vunpack.c.l.bf16 %v698
        %v715 = vunpack.c.l.bf16 %v699
        %v716 = vunpack.c.l.bf16 %v700
        %v717 = vunpack.c.l.bf16 %v701
        %s718 = sld [smem:[#allocation5]]
        %v719 = vmul.f32 %v670, %v702
        %v720 = vmul.f32 %v671, %v703
        %v721 = vmul.f32 %v672, %v704
        %v722 = vmul.f32 %v673, %v705
        %v723 = vmul.f32 %v674, %v706
        %v724 = vmul.f32 %v675, %v707
        %v725 = vmul.f32 %v676, %v708
        %v726 = vmul.f32 %v677, %v709
        %v727 = vmul.f32 %v678, %v710
        %v728 = vmul.f32 %v679, %v711
        %v729 = vmul.f32 %v680, %v712
        %v730 = vmul.f32 %v681, %v713
        %v731 = vmul.f32 %v682, %v714
        %v732 = vmul.f32 %v683, %v715
        %v733 = vmul.f32 %v684, %v716
        %v734 = vmul.f32 %v685, %v717
        %v735 = vsel %vm451, %v719, 0.0
        %v736 = vsel %vm451, %v720, 0.0
        %v737 = vadd.f32 %v735, %v736
        %v738 = vsel %vm451, %v721, 0.0
        %v739 = vadd.f32 %v737, %v738
        %v740 = vsel %vm451, %v722, 0.0
        %v741 = vadd.f32 %v739, %v740
        %v742 = vsel %vm451, %v723, 0.0
        %v743 = vadd.f32 %v741, %v742
        %v744 = vsel %vm451, %v724, 0.0
        %v745 = vadd.f32 %v743, %v744
        %v746 = vsel %vm451, %v725, 0.0
        %v747 = vadd.f32 %v745, %v746
        %v748 = vsel %vm451, %v726, 0.0
        %v749 = vadd.f32 %v747, %v748
        %v750 = vsel %vm451, %v727, 0.0
        %v751 = vadd.f32 %v749, %v750
        %v752 = vsel %vm451, %v728, 0.0
        %v753 = vadd.f32 %v751, %v752
        %v754 = vsel %vm451, %v729, 0.0
        %v755 = vadd.f32 %v753, %v754
        %v756 = vsel %vm451, %v730, 0.0
        %v757 = vadd.f32 %v755, %v756
        %v758 = vsel %vm451, %v731, 0.0
        %v759 = vadd.f32 %v757, %v758
        %v760 = vsel %vm451, %v732, 0.0
        %v761 = vadd.f32 %v759, %v760
        %v762 = vsel %vm451, %v733, 0.0
        %v763 = vadd.f32 %v761, %v762
        %v764 = vsel %vm451, %v734, 0.0
        %v765 = vadd.f32 %v763, %v764
        %766 = vadd.xlane.f32.xlu0 %v765
        %v767 = vpop.xlane.xlu0 %766
        %v768 = vrot.slane %v767, 4
        %v769 = vadd.f32 %v767, %v768
        %v770 = vrot.slane %v769, 2
        %v771 = vadd.f32 %v769, %v770
        %v772 = vrot.slane %v771, 1
        %v773 = vadd.f32 %v771, %v772
        %s774 = vtos %v773
        %s775 = smul.f32 %s282, %s774
        %s776 = sadd.f32 %s718, %s775
        %s777 = scalar_lea.smem [#allocation5], 0
        %778 = sst [smem:[%s777]] %s776
        %v779 = vmax.f32 %v638, %v639
        %780 = vmax.xlane.f32.xlu0 %v779
        %v781 = vpop.xlane.xlu0 %780
        %v782 = vmax.f32 %v640, %v641
        %783 = vmax.xlane.f32.xlu0 %v782
        %v784 = vpop.xlane.xlu0 %783
        %v785 = vmax.f32 %v642, %v643
        %786 = vmax.xlane.f32.xlu0 %v785
        %v787 = vpop.xlane.xlu0 %786
        %v788 = vmax.f32 %v644, %v645
        %789 = vmax.xlane.f32.xlu0 %v788
        %v790 = vpop.xlane.xlu0 %789
        %v791 = vmax.f32 %v646, %v647
        %792 = vmax.xlane.f32.xlu0 %v791
        %v793 = vpop.xlane.xlu0 %792
        %v794 = vmax.f32 %v648, %v649
        %795 = vmax.xlane.f32.xlu0 %v794
        %v796 = vpop.xlane.xlu0 %795
        %v797 = vmax.f32 %v650, %v651
        %798 = vmax.xlane.f32.xlu0 %v797
        %v799 = vpop.xlane.xlu0 %798
        %v800 = vmax.f32 %v652, %v653
        %801 = vmax.xlane.f32.xlu0 %v800
        %v802 = vpop.xlane.xlu0 %801
        %v803 = vmax.f32 %v654, %v655
        %804 = vmax.xlane.f32.xlu0 %v803
        %v805 = vpop.xlane.xlu0 %804
        %v806 = vmax.f32 %v656, %v657
        %807 = vmax.xlane.f32.xlu0 %v806
        %v808 = vpop.xlane.xlu0 %807
        %v809 = vmax.f32 %v658, %v659
        %810 = vmax.xlane.f32.xlu0 %v809
        %v811 = vpop.xlane.xlu0 %810
        %v812 = vmax.f32 %v660, %v661
        %813 = vmax.xlane.f32.xlu0 %v812
        %v814 = vpop.xlane.xlu0 %813
        %v815 = vmax.f32 %v662, %v663
        %816 = vmax.xlane.f32.xlu0 %v815
        %v817 = vpop.xlane.xlu0 %816
        %v818 = vmax.f32 %v664, %v665
        %819 = vmax.xlane.f32.xlu0 %v818
        %v820 = vpop.xlane.xlu0 %819
        %v821 = vmax.f32 %v666, %v667
        %822 = vmax.xlane.f32.xlu0 %v821
        %v823 = vpop.xlane.xlu0 %822
        %v824 = vmax.f32 %v668, %v669
        %825 = vmax.xlane.f32.xlu0 %v824
        %v826 = vpop.xlane.xlu0 %825
        %v827 = vsub.f32 %v638, %v781
        %v828 = vsub.f32 %v639, %v781
        %v829 = vsub.f32 %v640, %v784
        %v830 = vsub.f32 %v641, %v784
        %v831 = vsub.f32 %v642, %v787
        %v832 = vsub.f32 %v643, %v787
        %v833 = vsub.f32 %v644, %v790
        %v834 = vsub.f32 %v645, %v790
        %v835 = vsub.f32 %v646, %v793
        %v836 = vsub.f32 %v647, %v793
        %v837 = vsub.f32 %v648, %v796
        %v838 = vsub.f32 %v649, %v796
        %v839 = vsub.f32 %v650, %v799
        %v840 = vsub.f32 %v651, %v799
        %v841 = vsub.f32 %v652, %v802
        %v842 = vsub.f32 %v653, %v802
        %v843 = vsub.f32 %v654, %v805
        %v844 = vsub.f32 %v655, %v805
        %v845 = vsub.f32 %v656, %v808
        %v846 = vsub.f32 %v657, %v808
        %v847 = vsub.f32 %v658, %v811
        %v848 = vsub.f32 %v659, %v811
        %v849 = vsub.f32 %v660, %v814
        %v850 = vsub.f32 %v661, %v814
        %v851 = vsub.f32 %v662, %v817
        %v852 = vsub.f32 %v663, %v817
        %v853 = vsub.f32 %v664, %v820
        %v854 = vsub.f32 %v665, %v820
        %v855 = vsub.f32 %v666, %v823
        %v856 = vsub.f32 %v667, %v823
        %v857 = vsub.f32 %v668, %v826
        %v858 = vsub.f32 %v669, %v826
        %v859 = vmul.f32 %v827, 1.442695
        %v860 = vpow.pop %v859
        %v861 = vmul.f32 %v828, 1.442695
        %v862 = vpow.pop %v861
        %v863 = vmul.f32 %v829, 1.442695
        %v864 = vpow.pop %v863
        %v865 = vmul.f32 %v830, 1.442695
        %v866 = vpow.pop %v865
        %v867 = vmul.f32 %v831, 1.442695
        %v868 = vpow.pop %v867
        %v869 = vmul.f32 %v832, 1.442695
        %v870 = vpow.pop %v869
        %v871 = vmul.f32 %v833, 1.442695
        %v872 = vpow.pop %v871
        %v873 = vmul.f32 %v834, 1.442695
        %v874 = vpow.pop %v873
        %v875 = vmul.f32 %v835, 1.442695
        %v876 = vpow.pop %v875
        %v877 = vmul.f32 %v836, 1.442695
        %v878 = vpow.pop %v877
        %v879 = vmul.f32 %v837, 1.442695
        %v880 = vpow.pop %v879
        %v881 = vmul.f32 %v838, 1.442695
        %v882 = vpow.pop %v881
        %v883 = vmul.f32 %v839, 1.442695
        %v884 = vpow.pop %v883
        %v885 = vmul.f32 %v840, 1.442695
        %v886 = vpow.pop %v885
        %v887 = vmul.f32 %v841, 1.442695
        %v888 = vpow.pop %v887
        %v889 = vmul.f32 %v842, 1.442695
        %v890 = vpow.pop %v889
        %v891 = vmul.f32 %v843, 1.442695
        %v892 = vpow.pop %v891
        %v893 = vmul.f32 %v844, 1.442695
        %v894 = vpow.pop %v893
        %v895 = vmul.f32 %v845, 1.442695
        %v896 = vpow.pop %v895
        %v897 = vmul.f32 %v846, 1.442695
        %v898 = vpow.pop %v897
        %v899 = vmul.f32 %v847, 1.442695
        %v900 = vpow.pop %v899
        %v901 = vmul.f32 %v848, 1.442695
        %v902 = vpow.pop %v901
        %v903 = vmul.f32 %v849, 1.442695
        %v904 = vpow.pop %v903
        %v905 = vmul.f32 %v850, 1.442695
        %v906 = vpow.pop %v905
        %v907 = vmul.f32 %v851, 1.442695
        %v908 = vpow.pop %v907
        %v909 = vmul.f32 %v852, 1.442695
        %v910 = vpow.pop %v909
        %v911 = vmul.f32 %v853, 1.442695
        %v912 = vpow.pop %v911
        %v913 = vmul.f32 %v854, 1.442695
        %v914 = vpow.pop %v913
        %v915 = vmul.f32 %v855, 1.442695
        %v916 = vpow.pop %v915
        %v917 = vmul.f32 %v856, 1.442695
        %v918 = vpow.pop %v917
        %v919 = vmul.f32 %v857, 1.442695
        %v920 = vpow.pop %v919
        %v921 = vmul.f32 %v858, 1.442695
        %v922 = vpow.pop %v921
        %v923 = vadd.f32 %v860, %v862
        %924 = vadd.xlane.f32.xlu0 %v923
        %v925 = vpop.xlane.xlu0 %924
        %v926 = vadd.f32 %v864, %v866
        %927 = vadd.xlane.f32.xlu0 %v926
        %v928 = vpop.xlane.xlu0 %927
        %v929 = vadd.f32 %v868, %v870
        %930 = vadd.xlane.f32.xlu0 %v929
        %v931 = vpop.xlane.xlu0 %930
        %v932 = vadd.f32 %v872, %v874
        %933 = vadd.xlane.f32.xlu0 %v932
        %v934 = vpop.xlane.xlu0 %933
        %v935 = vadd.f32 %v876, %v878
        %936 = vadd.xlane.f32.xlu0 %v935
        %v937 = vpop.xlane.xlu0 %936
        %v938 = vadd.f32 %v880, %v882
        %939 = vadd.xlane.f32.xlu0 %v938
        %v940 = vpop.xlane.xlu0 %939
        %v941 = vadd.f32 %v884, %v886
        %942 = vadd.xlane.f32.xlu0 %v941
        %v943 = vpop.xlane.xlu0 %942
        %v944 = vadd.f32 %v888, %v890
        %945 = vadd.xlane.f32.xlu0 %v944
        %v946 = vpop.xlane.xlu0 %945
        %v947 = vadd.f32 %v892, %v894
        %948 = vadd.xlane.f32.xlu0 %v947
        %v949 = vpop.xlane.xlu0 %948
        %v950 = vadd.f32 %v896, %v898
        %951 = vadd.xlane.f32.xlu0 %v950
        %v952 = vpop.xlane.xlu0 %951
        %v953 = vadd.f32 %v900, %v902
        %954 = vadd.xlane.f32.xlu0 %v953
        %v955 = vpop.xlane.xlu0 %954
        %v956 = vadd.f32 %v904, %v906
        %957 = vadd.xlane.f32.xlu0 %v956
        %v958 = vpop.xlane.xlu0 %957
        %v959 = vadd.f32 %v908, %v910
        %960 = vadd.xlane.f32.xlu0 %v959
        %v961 = vpop.xlane.xlu0 %960
        %v962 = vadd.f32 %v912, %v914
        %963 = vadd.xlane.f32.xlu0 %v962
        %v964 = vpop.xlane.xlu0 %963
        %v965 = vadd.f32 %v916, %v918
        %966 = vadd.xlane.f32.xlu0 %v965
        %v967 = vpop.xlane.xlu0 %966
        %v968 = vadd.f32 %v920, %v922
        %969 = vadd.xlane.f32.xlu0 %v968
        %v970 = vpop.xlane.xlu0 %969
        %s971 = sld [smem:[#allocation4]]
        %v972 = vlog2.pop %v925
        %v973 = vmul.f32 %v972, 0.6931472
        %v974 = vlog2.pop %v928
        %v975 = vmul.f32 %v974, 0.6931472
        %v976 = vlog2.pop %v931
        %v977 = vmul.f32 %v976, 0.6931472
        %v978 = vlog2.pop %v934
        %v979 = vmul.f32 %v978, 0.6931472
        %v980 = vlog2.pop %v937
        %v981 = vmul.f32 %v980, 0.6931472
        %v982 = vlog2.pop %v940
        %v983 = vmul.f32 %v982, 0.6931472
        %v984 = vlog2.pop %v943
        %v985 = vmul.f32 %v984, 0.6931472
        %v986 = vlog2.pop %v946
        %v987 = vmul.f32 %v986, 0.6931472
        %v988 = vlog2.pop %v949
        %v989 = vmul.f32 %v988, 0.6931472
        %v990 = vlog2.pop %v952
        %v991 = vmul.f32 %v990, 0.6931472
        %v992 = vlog2.pop %v955
        %v993 = vmul.f32 %v992, 0.6931472
        %v994 = vlog2.pop %v958
        %v995 = vmul.f32 %v994, 0.6931472
        %v996 = vlog2.pop %v961
        %v997 = vmul.f32 %v996, 0.6931472
        %v998 = vlog2.pop %v964
        %v999 = vmul.f32 %v998, 0.6931472
        %v1000 = vlog2.pop %v967
        %v1001 = vmul.f32 %v1000, 0.6931472
        %v1002 = vlog2.pop %v970
        %v1003 = vmul.f32 %v1002, 0.6931472
        %v1004 = vadd.f32 %v973, %v781
        %v1005 = vadd.f32 %v975, %v784
        %v1006 = vadd.f32 %v977, %v787
        %v1007 = vadd.f32 %v979, %v790
        %v1008 = vadd.f32 %v981, %v793
        %v1009 = vadd.f32 %v983, %v796
        %v1010 = vadd.f32 %v985, %v799
        %v1011 = vadd.f32 %v987, %v802
        %v1012 = vadd.f32 %v989, %v805
        %v1013 = vadd.f32 %v991, %v808
        %v1014 = vadd.f32 %v993, %v811
        %v1015 = vadd.f32 %v995, %v814
        %v1016 = vadd.f32 %v997, %v817
        %v1017 = vadd.f32 %v999, %v820
        %v1018 = vadd.f32 %v1001, %v823
        %v1019 = vadd.f32 %v1003, %v826
        %vm1020 = vcmask 7168
        %v1021 = vsel %vm1020, %v1004, 0.0
        %v1022 = vsel %vm1020, %v1005, 0.0
        %v1023 = vadd.f32 %v1021, %v1022
        %v1024 = vsel %vm1020, %v1006, 0.0
        %v1025 = vadd.f32 %v1023, %v1024
        %v1026 = vsel %vm1020, %v1007, 0.0
        %v1027 = vadd.f32 %v1025, %v1026
        %v1028 = vsel %vm1020, %v1008, 0.0
        %v1029 = vadd.f32 %v1027, %v1028
        %v1030 = vsel %vm1020, %v1009, 0.0
        %v1031 = vadd.f32 %v1029, %v1030
        %v1032 = vsel %vm1020, %v1010, 0.0
        %v1033 = vadd.f32 %v1031, %v1032
        %v1034 = vsel %vm1020, %v1011, 0.0
        %v1035 = vadd.f32 %v1033, %v1034
        %v1036 = vsel %vm1020, %v1012, 0.0
        %v1037 = vadd.f32 %v1035, %v1036
        %v1038 = vsel %vm1020, %v1013, 0.0
        %v1039 = vadd.f32 %v1037, %v1038
        %v1040 = vsel %vm1020, %v1014, 0.0
        %v1041 = vadd.f32 %v1039, %v1040
        %v1042 = vsel %vm1020, %v1015, 0.0
        %v1043 = vadd.f32 %v1041, %v1042
        %v1044 = vsel %vm1020, %v1016, 0.0
        %v1045 = vadd.f32 %v1043, %v1044
        %v1046 = vsel %vm1020, %v1017, 0.0
        %v1047 = vadd.f32 %v1045, %v1046
        %v1048 = vsel %vm1020, %v1018, 0.0
        %v1049 = vadd.f32 %v1047, %v1048
        %v1050 = vsel %vm1020, %v1019, 0.0
        %v1051 = vadd.f32 %v1049, %v1050
        %1052 = vadd.xlane.f32.xlu0 %v1051
        %v1053 = vpop.xlane.xlu0 %1052
        %v1054 = vrot.slane %v1053, 4
        %v1055 = vadd.f32 %v1053, %v1054
        %v1056 = vrot.slane %v1055, 2
        %v1057 = vadd.f32 %v1055, %v1056
        %v1058 = vrot.slane %v1057, 1
        %v1059 = vadd.f32 %v1057, %v1058
        %s1060 = vtos %v1059
        %s1061 = sadd.f32 %s971, %s1060
        %s1062 = scalar_lea.smem [#allocation4], 0
        %1063 = sst [smem:[%s1062]] %s1061
        %v1064 = vmax.f32 %v638, %v642
        %v1065 = vmax.f32 %v640, %v644
        %v1066 = vmax.f32 %v1064, %v646
        %v1067 = vmax.f32 %v1065, %v648
        %v1068 = vmax.f32 %v1066, %v650
        %v1069 = vmax.f32 %v1067, %v652
        %v1070 = vmax.f32 %v1068, %v654
        %v1071 = vmax.f32 %v1069, %v656
        %v1072 = vmax.f32 %v1070, %v658
        %v1073 = vmax.f32 %v1071, %v660
        %v1074 = vmax.f32 %v1072, %v662
        %v1075 = vmax.f32 %v1073, %v664
        %v1076 = vmax.f32 %v1074, %v666
        %v1077 = vmax.f32 %v1075, %v668
        %v1078 = vmax.f32 %v1076, %v1077
        %v1079 = vrot.slane %v1078, 4
        %v1080 = vmax.f32 %v1078, %v1079
        %v1081 = vrot.slane %v1080, 2
        %v1082 = vmax.f32 %v1080, %v1081
        %v1083 = vrot.slane %v1082, 1
        %v1084 = vmax.f32 %v1082, %v1083
        %v1085 = vmax.f32 %v639, %v643
        %v1086 = vmax.f32 %v641, %v645
        %v1087 = vmax.f32 %v1085, %v647
        %v1088 = vmax.f32 %v1086, %v649
        %v1089 = vmax.f32 %v1087, %v651
        %v1090 = vmax.f32 %v1088, %v653
        %v1091 = vmax.f32 %v1089, %v655
        %v1092 = vmax.f32 %v1090, %v657
        %v1093 = vmax.f32 %v1091, %v659
        %v1094 = vmax.f32 %v1092, %v661
        %v1095 = vmax.f32 %v1093, %v663
        %v1096 = vmax.f32 %v1094, %v665
        %v1097 = vmax.f32 %v1095, %v667
        %v1098 = vmax.f32 %v1096, %v669
        %v1099 = vmax.f32 %v1097, %v1098
        %v1100 = vrot.slane %v1099, 4
        %v1101 = vmax.f32 %v1099, %v1100
        %v1102 = vrot.slane %v1101, 2
        %v1103 = vmax.f32 %v1101, %v1102
        %v1104 = vrot.slane %v1103, 1
        %v1105 = vmax.f32 %v1103, %v1104
        %v1106 = vld [vmem:[#allocation2] sm:$0x3]
        %v1109 = vcombine.low %v1084, %v1105
        %v1111 = vunpack.c.l.s4 1966171168
        %v1112 = vunpack.c.0.s8 %v1111
        %v1113 = vlaneseq
        %v1114 = vshrl.u32 %v1113, 7
        %v1115 = vsub.s32 %v1112, %v1114
        %v1116 = vrot.slane %v1109, %v1115
        %v1118 = vunpack.c.l.s4 1966171168
        %v1119 = vunpack.c.0.s8 %v1118
        %v1120 = vlaneseq
        %v1121 = vshrl.u32 %v1120, 7
        %v1122 = vsub.s32 %v1119, %v1121
        %v1123 = vrot.slane %v1116, %v1122
        %v1125 = vmax.f32 %v1106, %v1123
        %v1127 = vlaneseq
        %v1128 = vshrl.u32 %v1127, 7
        %v1129 = vsub.s32 0, %v1128
        %v1130 = vrot.slane %v1125, %v1129
        %v1131 = vlaneseq
        %v1132 = vshrl.u32 %v1131, 7
        %v1133 = vsub.s32 1, %v1132
        %v1134 = vrot.slane %v1125, %v1133
        %v1137 = vsub.f32 %v638, %v1130
        %v1138 = vsub.f32 %v639, %v1134
        %v1139 = vsub.f32 %v640, %v1130
        %v1140 = vsub.f32 %v641, %v1134
        %v1141 = vsub.f32 %v642, %v1130
        %v1142 = vsub.f32 %v643, %v1134
        %v1143 = vsub.f32 %v644, %v1130
        %v1144 = vsub.f32 %v645, %v1134
        %v1145 = vsub.f32 %v646, %v1130
        %v1146 = vsub.f32 %v647, %v1134
        %v1147 = vsub.f32 %v648, %v1130
        %v1148 = vsub.f32 %v649, %v1134
        %v1149 = vsub.f32 %v650, %v1130
        %v1150 = vsub.f32 %v651, %v1134
        %v1151 = vsub.f32 %v652, %v1130
        %v1152 = vsub.f32 %v653, %v1134
        %v1153 = vsub.f32 %v654, %v1130
        %v1154 = vsub.f32 %v655, %v1134
        %v1155 = vsub.f32 %v656, %v1130
        %v1156 = vsub.f32 %v657, %v1134
        %v1157 = vsub.f32 %v658, %v1130
        %v1158 = vsub.f32 %v659, %v1134
        %v1159 = vsub.f32 %v660, %v1130
        %v1160 = vsub.f32 %v661, %v1134
        %v1161 = vsub.f32 %v662, %v1130
        %v1162 = vsub.f32 %v663, %v1134
        %v1163 = vsub.f32 %v664, %v1130
        %v1164 = vsub.f32 %v665, %v1134
        %v1165 = vsub.f32 %v666, %v1130
        %v1166 = vsub.f32 %v667, %v1134
        %v1167 = vsub.f32 %v668, %v1130
        %v1168 = vsub.f32 %v669, %v1134
        %v1169 = vmul.f32 %v1137, 1.442695
        %v1170 = vpow.pop %v1169
        %v1171 = vmul.f32 %v1138, 1.442695
        %v1172 = vpow.pop %v1171
        %v1173 = vmul.f32 %v1139, 1.442695
        %v1174 = vpow.pop %v1173
        %v1175 = vmul.f32 %v1140, 1.442695
        %v1176 = vpow.pop %v1175
        %v1177 = vmul.f32 %v1141, 1.442695
        %v1178 = vpow.pop %v1177
        %v1179 = vmul.f32 %v1142, 1.442695
        %v1180 = vpow.pop %v1179
        %v1181 = vmul.f32 %v1143, 1.442695
        %v1182 = vpow.pop %v1181
        %v1183 = vmul.f32 %v1144, 1.442695
        %v1184 = vpow.pop %v1183
        %v1185 = vmul.f32 %v1145, 1.442695
        %v1186 = vpow.pop %v1185
        %v1187 = vmul.f32 %v1146, 1.442695
        %v1188 = vpow.pop %v1187
        %v1189 = vmul.f32 %v1147, 1.442695
        %v1190 = vpow.pop %v1189
        %v1191 = vmul.f32 %v1148, 1.442695
        %v1192 = vpow.pop %v1191
        %v1193 = vmul.f32 %v1149, 1.442695
        %v1194 = vpow.pop %v1193
        %v1195 = vmul.f32 %v1150, 1.442695
        %v1196 = vpow.pop %v1195
        %v1197 = vmul.f32 %v1151, 1.442695
        %v1198 = vpow.pop %v1197
        %v1199 = vmul.f32 %v1152, 1.442695
        %v1200 = vpow.pop %v1199
        %v1201 = vmul.f32 %v1153, 1.442695
        %v1202 = vpow.pop %v1201
        %v1203 = vmul.f32 %v1154, 1.442695
        %v1204 = vpow.pop %v1203
        %v1205 = vmul.f32 %v1155, 1.442695
        %v1206 = vpow.pop %v1205
        %v1207 = vmul.f32 %v1156, 1.442695
        %v1208 = vpow.pop %v1207
        %v1209 = vmul.f32 %v1157, 1.442695
        %v1210 = vpow.pop %v1209
        %v1211 = vmul.f32 %v1158, 1.442695
        %v1212 = vpow.pop %v1211
        %v1213 = vmul.f32 %v1159, 1.442695
        %v1214 = vpow.pop %v1213
        %v1215 = vmul.f32 %v1160, 1.442695
        %v1216 = vpow.pop %v1215
        %v1217 = vmul.f32 %v1161, 1.442695
        %v1218 = vpow.pop %v1217
        %v1219 = vmul.f32 %v1162, 1.442695
        %v1220 = vpow.pop %v1219
        %v1221 = vmul.f32 %v1163, 1.442695
        %v1222 = vpow.pop %v1221
        %v1223 = vmul.f32 %v1164, 1.442695
        %v1224 = vpow.pop %v1223
        %v1225 = vmul.f32 %v1165, 1.442695
        %v1226 = vpow.pop %v1225
        %v1227 = vmul.f32 %v1166, 1.442695
        %v1228 = vpow.pop %v1227
        %v1229 = vmul.f32 %v1167, 1.442695
        %v1230 = vpow.pop %v1229
        %v1231 = vmul.f32 %v1168, 1.442695
        %v1232 = vpow.pop %v1231
        %v1233 = vadd.f32 %v1170, %v1174
        %v1234 = vadd.f32 %v1233, %v1178
        %v1235 = vadd.f32 %v1234, %v1182
        %v1236 = vadd.f32 %v1235, %v1186
        %v1237 = vadd.f32 %v1236, %v1190
        %v1238 = vadd.f32 %v1237, %v1194
        %v1239 = vadd.f32 %v1238, %v1198
        %v1240 = vadd.f32 %v1239, %v1202
        %v1241 = vadd.f32 %v1240, %v1206
        %v1242 = vadd.f32 %v1241, %v1210
        %v1243 = vadd.f32 %v1242, %v1214
        %v1244 = vadd.f32 %v1243, %v1218
        %v1245 = vadd.f32 %v1244, %v1222
        %v1246 = vadd.f32 %v1245, %v1226
        %v1247 = vadd.f32 %v1246, %v1230
        %v1248 = vrot.slane %v1247, 4
        %v1249 = vadd.f32 %v1247, %v1248
        %v1250 = vrot.slane %v1249, 2
        %v1251 = vadd.f32 %v1249, %v1250
        %v1252 = vrot.slane %v1251, 1
        %v1253 = vadd.f32 %v1251, %v1252
        %v1254 = vadd.f32 %v1172, %v1176
        %v1255 = vadd.f32 %v1254, %v1180
        %v1256 = vadd.f32 %v1255, %v1184
        %v1257 = vadd.f32 %v1256, %v1188
        %v1258 = vadd.f32 %v1257, %v1192
        %v1259 = vadd.f32 %v1258, %v1196
        %v1260 = vadd.f32 %v1259, %v1200
        %v1261 = vadd.f32 %v1260, %v1204
        %v1262 = vadd.f32 %v1261, %v1208
        %v1263 = vadd.f32 %v1262, %v1212
        %v1264 = vadd.f32 %v1263, %v1216
        %v1265 = vadd.f32 %v1264, %v1220
        %v1266 = vadd.f32 %v1265, %v1224
        %v1267 = vadd.f32 %v1266, %v1228
        %v1268 = vadd.f32 %v1267, %v1232
        %v1269 = vrot.slane %v1268, 4
        %v1270 = vadd.f32 %v1268, %v1269
        %v1271 = vrot.slane %v1270, 2
        %v1272 = vadd.f32 %v1270, %v1271
        %v1273 = vrot.slane %v1272, 1
        %v1274 = vadd.f32 %v1272, %v1273
        %v1275 = vld [vmem:[#allocation3] sm:$0x3]
        %v1276 = vsub.f32 %v1106, %v1125
        %v1277 = vmul.f32 %v1276, 1.442695
        %v1278 = vpow.pop %v1277
        %v1279 = vmul.f32 %v1275, %v1278
        %v1282 = vcombine.low %v1253, %v1274
        %v1284 = vunpack.c.l.s4 1966171168
        %v1285 = vunpack.c.0.s8 %v1284
        %v1286 = vlaneseq
        %v1287 = vshrl.u32 %v1286, 7
        %v1288 = vsub.s32 %v1285, %v1287
        %v1289 = vrot.slane %v1282, %v1288
        %v1291 = vunpack.c.l.s4 1966171168
        %v1292 = vunpack.c.0.s8 %v1291
        %v1293 = vlaneseq
        %v1294 = vshrl.u32 %v1293, 7
        %v1295 = vsub.s32 %v1292, %v1294
        %v1296 = vrot.slane %v1289, %v1295
        %v1298 = vadd.f32 %v1279, %v1296
        %v1299 = vlaneseq
        %vm1300 = vcmp.ge.s32.totalorder %v1299, 0
        %vm1301 = vcmp.lt.s32.totalorder %v1299, 256
        %vm1302 = vmand %vm1300, %vm1301
        %1303 = vst.msk [vmem:[#allocation3] sm:$0x3] %vm1302, %v1298
        %1304 = vst.msk [vmem:[#allocation2] sm:$0x3] %vm1302, %v1125
        %v1305 = vmax.f32 %v638, 0.0
        %v1306 = vmax.f32 %v639, 0.0
        %v1307 = vmax.f32 %v640, 0.0
        %v1308 = vmax.f32 %v641, 0.0
        %v1309 = vmax.f32 %v642, 0.0
        %v1310 = vmax.f32 %v643, 0.0
        %v1311 = vmax.f32 %v644, 0.0
        %v1312 = vmax.f32 %v645, 0.0
        %v1313 = vmax.f32 %v646, 0.0
        %v1314 = vmax.f32 %v647, 0.0
        %v1315 = vmax.f32 %v648, 0.0
        %v1316 = vmax.f32 %v649, 0.0
        %v1317 = vmax.f32 %v650, 0.0
        %v1318 = vmax.f32 %v651, 0.0
        %v1319 = vmax.f32 %v652, 0.0
        %v1320 = vmax.f32 %v653, 0.0
        %v1321 = vmax.f32 %v654, 0.0
        %v1322 = vmax.f32 %v655, 0.0
        %v1323 = vmax.f32 %v656, 0.0
        %v1324 = vmax.f32 %v657, 0.0
        %v1325 = vmax.f32 %v658, 0.0
        %v1326 = vmax.f32 %v659, 0.0
        %v1327 = vmax.f32 %v660, 0.0
        %v1328 = vmax.f32 %v661, 0.0
        %v1329 = vmax.f32 %v662, 0.0
        %v1330 = vmax.f32 %v663, 0.0
        %v1331 = vmax.f32 %v664, 0.0
        %v1332 = vmax.f32 %v665, 0.0
        %v1333 = vmax.f32 %v666, 0.0
        %v1334 = vmax.f32 %v667, 0.0
        %v1335 = vmax.f32 %v668, 0.0
        %v1336 = vmax.f32 %v669, 0.0
        %v1337 = vand.u32 2147483647, %v638
        %v1338 = vand.u32 2147483647, %v639
        %v1339 = vand.u32 2147483647, %v640
        %v1340 = vand.u32 2147483647, %v641
        %v1341 = vand.u32 2147483647, %v642
        %v1342 = vand.u32 2147483647, %v643
        %v1343 = vand.u32 2147483647, %v644
        %v1344 = vand.u32 2147483647, %v645
        %v1345 = vand.u32 2147483647, %v646
        %v1346 = vand.u32 2147483647, %v647
        %v1347 = vand.u32 2147483647, %v648
        %v1348 = vand.u32 2147483647, %v649
        %v1349 = vand.u32 2147483647, %v650
        %v1350 = vand.u32 2147483647, %v651
        %v1351 = vand.u32 2147483647, %v652
        %v1352 = vand.u32 2147483647, %v653
        %v1353 = vand.u32 2147483647, %v654
        %v1354 = vand.u32 2147483647, %v655
        %v1355 = vand.u32 2147483647, %v656
        %v1356 = vand.u32 2147483647, %v657
        %v1357 = vand.u32 2147483647, %v658
        %v1358 = vand.u32 2147483647, %v659
        %v1359 = vand.u32 2147483647, %v660
        %v1360 = vand.u32 2147483647, %v661
        %v1361 = vand.u32 2147483647, %v662
        %v1362 = vand.u32 2147483647, %v663
        %v1363 = vand.u32 2147483647, %v664
        %v1364 = vand.u32 2147483647, %v665
        %v1365 = vand.u32 2147483647, %v666
        %v1366 = vand.u32 2147483647, %v667
        %v1367 = vand.u32 2147483647, %v668
        %v1368 = vand.u32 2147483647, %v669
        %v1369 = vsub.f32 0.0, %v1337
        %v1370 = vsub.f32 0.0, %v1338
        %v1371 = vsub.f32 0.0, %v1339
        %v1372 = vsub.f32 0.0, %v1340
        %v1373 = vsub.f32 0.0, %v1341
        %v1374 = vsub.f32 0.0, %v1342
        %v1375 = vsub.f32 0.0, %v1343
        %v1376 = vsub.f32 0.0, %v1344
        %v1377 = vsub.f32 0.0, %v1345
        %v1378 = vsub.f32 0.0, %v1346
        %v1379 = vsub.f32 0.0, %v1347
        %v1380 = vsub.f32 0.0, %v1348
        %v1381 = vsub.f32 0.0, %v1349
        %v1382 = vsub.f32 0.0, %v1350
        %v1383 = vsub.f32 0.0, %v1351
        %v1384 = vsub.f32 0.0, %v1352
        %v1385 = vsub.f32 0.0, %v1353
        %v1386 = vsub.f32 0.0, %v1354
        %v1387 = vsub.f32 0.0, %v1355
        %v1388 = vsub.f32 0.0, %v1356
        %v1389 = vsub.f32 0.0, %v1357
        %v1390 = vsub.f32 0.0, %v1358
        %v1391 = vsub.f32 0.0, %v1359
        %v1392 = vsub.f32 0.0, %v1360
        %v1393 = vsub.f32 0.0, %v1361
        %v1394 = vsub.f32 0.0, %v1362
        %v1395 = vsub.f32 0.0, %v1363
        %v1396 = vsub.f32 0.0, %v1364
        %v1397 = vsub.f32 0.0, %v1365
        %v1398 = vsub.f32 0.0, %v1366
        %v1399 = vsub.f32 0.0, %v1367
        %v1400 = vsub.f32 0.0, %v1368
        %v1401 = vmul.f32 %v1369, 1.442695
        %v1402 = vpow.pop %v1401
        %v1403 = vmul.f32 %v1370, 1.442695
        %v1404 = vpow.pop %v1403
        %v1405 = vmul.f32 %v1371, 1.442695
        %v1406 = vpow.pop %v1405
        %v1407 = vmul.f32 %v1372, 1.442695
        %v1408 = vpow.pop %v1407
        %v1409 = vmul.f32 %v1373, 1.442695
        %v1410 = vpow.pop %v1409
        %v1411 = vmul.f32 %v1374, 1.442695
        %v1412 = vpow.pop %v1411
        %v1413 = vmul.f32 %v1375, 1.442695
        %v1414 = vpow.pop %v1413
        %v1415 = vmul.f32 %v1376, 1.442695
        %v1416 = vpow.pop %v1415
        %v1417 = vmul.f32 %v1377, 1.442695
        %v1418 = vpow.pop %v1417
        %v1419 = vmul.f32 %v1378, 1.442695
        %v1420 = vpow.pop %v1419
        %v1421 = vmul.f32 %v1379, 1.442695
        %v1422 = vpow.pop %v1421
        %v1423 = vmul.f32 %v1380, 1.442695
        %v1424 = vpow.pop %v1423
        %v1425 = vmul.f32 %v1381, 1.442695
        %v1426 = vpow.pop %v1425
        %v1427 = vmul.f32 %v1382, 1.442695
        %v1428 = vpow.pop %v1427
        %v1429 = vmul.f32 %v1383, 1.442695
        %v1430 = vpow.pop %v1429
        %v1431 = vmul.f32 %v1384, 1.442695
        %v1432 = vpow.pop %v1431
        %v1433 = vmul.f32 %v1385, 1.442695
        %v1434 = vpow.pop %v1433
        %v1435 = vmul.f32 %v1386, 1.442695
        %v1436 = vpow.pop %v1435
        %v1437 = vmul.f32 %v1387, 1.442695
        %v1438 = vpow.pop %v1437
        %v1439 = vmul.f32 %v1388, 1.442695
        %v1440 = vpow.pop %v1439
        %v1441 = vmul.f32 %v1389, 1.442695
        %v1442 = vpow.pop %v1441
        %v1443 = vmul.f32 %v1390, 1.442695
        %v1444 = vpow.pop %v1443
        %v1445 = vmul.f32 %v1391, 1.442695
        %v1446 = vpow.pop %v1445
        %v1447 = vmul.f32 %v1392, 1.442695
        %v1448 = vpow.pop %v1447
        %v1449 = vmul.f32 %v1393, 1.442695
        %v1450 = vpow.pop %v1449
        %v1451 = vmul.f32 %v1394, 1.442695
        %v1452 = vpow.pop %v1451
        %v1453 = vmul.f32 %v1395, 1.442695
        %v1454 = vpow.pop %v1453
        %v1455 = vmul.f32 %v1396, 1.442695
        %v1456 = vpow.pop %v1455
        %v1457 = vmul.f32 %v1397, 1.442695
        %v1458 = vpow.pop %v1457
        %v1459 = vmul.f32 %v1398, 1.442695
        %v1460 = vpow.pop %v1459
        %v1461 = vmul.f32 %v1399, 1.442695
        %v1462 = vpow.pop %v1461
        %v1463 = vmul.f32 %v1400, 1.442695
        %v1464 = vpow.pop %v1463
        %v1465 = vadd.f32 %v1402, 1.0
        %v1466 = vlog2.pop %v1465
        %v1467 = vmul.f32 %v1466, 0.6931472
        %v1468 = vmul.f32 -0.5, %v1402
        %v1469 = vadd.f32 %v1468, 1.0
        %v1470 = vmul.f32 %v1469, %v1402
        %v1471 = vand.u32 2147483647, %v1402
        %vm1472 = vcmp.lt.f32.partialorder %v1471, 0.0004427343
        %v1473 = vsel %vm1472, %v1470, %v1467
        %v1474 = vadd.f32 %v1404, 1.0
        %v1475 = vlog2.pop %v1474
        %v1476 = vmul.f32 %v1475, 0.6931472
        %v1477 = vmul.f32 -0.5, %v1404
        %v1478 = vadd.f32 %v1477, 1.0
        %v1479 = vmul.f32 %v1478, %v1404
        %v1480 = vand.u32 2147483647, %v1404
        %vm1481 = vcmp.lt.f32.partialorder %v1480, 0.0004427343
        %v1482 = vsel %vm1481, %v1479, %v1476
        %v1483 = vadd.f32 %v1406, 1.0
        %v1484 = vlog2.pop %v1483
        %v1485 = vmul.f32 %v1484, 0.6931472
        %v1486 = vmul.f32 -0.5, %v1406
        %v1487 = vadd.f32 %v1486, 1.0
        %v1488 = vmul.f32 %v1487, %v1406
        %v1489 = vand.u32 2147483647, %v1406
        %vm1490 = vcmp.lt.f32.partialorder %v1489, 0.0004427343
        %v1491 = vsel %vm1490, %v1488, %v1485
        %v1492 = vadd.f32 %v1408, 1.0
        %v1493 = vlog2.pop %v1492
        %v1494 = vmul.f32 %v1493, 0.6931472
        %v1495 = vmul.f32 -0.5, %v1408
        %v1496 = vadd.f32 %v1495, 1.0
        %v1497 = vmul.f32 %v1496, %v1408
        %v1498 = vand.u32 2147483647, %v1408
        %vm1499 = vcmp.lt.f32.partialorder %v1498, 0.0004427343
        %v1500 = vsel %vm1499, %v1497, %v1494
        %v1501 = vadd.f32 %v1410, 1.0
        %v1502 = vlog2.pop %v1501
        %v1503 = vmul.f32 %v1502, 0.6931472
        %v1504 = vmul.f32 -0.5, %v1410
        %v1505 = vadd.f32 %v1504, 1.0
        %v1506 = vmul.f32 %v1505, %v1410
        %v1507 = vand.u32 2147483647, %v1410
        %vm1508 = vcmp.lt.f32.partialorder %v1507, 0.0004427343
        %v1509 = vsel %vm1508, %v1506, %v1503
        %v1510 = vadd.f32 %v1412, 1.0
        %v1511 = vlog2.pop %v1510
        %v1512 = vmul.f32 %v1511, 0.6931472
        %v1513 = vmul.f32 -0.5, %v1412
        %v1514 = vadd.f32 %v1513, 1.0
        %v1515 = vmul.f32 %v1514, %v1412
        %v1516 = vand.u32 2147483647, %v1412
        %vm1517 = vcmp.lt.f32.partialorder %v1516, 0.0004427343
        %v1518 = vsel %vm1517, %v1515, %v1512
        %v1519 = vadd.f32 %v1414, 1.0
        %v1520 = vlog2.pop %v1519
        %v1521 = vmul.f32 %v1520, 0.6931472
        %v1522 = vmul.f32 -0.5, %v1414
        %v1523 = vadd.f32 %v1522, 1.0
        %v1524 = vmul.f32 %v1523, %v1414
        %v1525 = vand.u32 2147483647, %v1414
        %vm1526 = vcmp.lt.f32.partialorder %v1525, 0.0004427343
        %v1527 = vsel %vm1526, %v1524, %v1521
        %v1528 = vadd.f32 %v1416, 1.0
        %v1529 = vlog2.pop %v1528
        %v1530 = vmul.f32 %v1529, 0.6931472
        %v1531 = vmul.f32 -0.5, %v1416
        %v1532 = vadd.f32 %v1531, 1.0
        %v1533 = vmul.f32 %v1532, %v1416
        %v1534 = vand.u32 2147483647, %v1416
        %vm1535 = vcmp.lt.f32.partialorder %v1534, 0.0004427343
        %v1536 = vsel %vm1535, %v1533, %v1530
        %v1537 = vadd.f32 %v1418, 1.0
        %v1538 = vlog2.pop %v1537
        %v1539 = vmul.f32 %v1538, 0.6931472
        %v1540 = vmul.f32 -0.5, %v1418
        %v1541 = vadd.f32 %v1540, 1.0
        %v1542 = vmul.f32 %v1541, %v1418
        %v1543 = vand.u32 2147483647, %v1418
        %vm1544 = vcmp.lt.f32.partialorder %v1543, 0.0004427343
        %v1545 = vsel %vm1544, %v1542, %v1539
        %v1546 = vadd.f32 %v1420, 1.0
        %v1547 = vlog2.pop %v1546
        %v1548 = vmul.f32 %v1547, 0.6931472
        %v1549 = vmul.f32 -0.5, %v1420
        %v1550 = vadd.f32 %v1549, 1.0
        %v1551 = vmul.f32 %v1550, %v1420
        %v1552 = vand.u32 2147483647, %v1420
        %vm1553 = vcmp.lt.f32.partialorder %v1552, 0.0004427343
        %v1554 = vsel %vm1553, %v1551, %v1548
        %v1555 = vadd.f32 %v1422, 1.0
        %v1556 = vlog2.pop %v1555
        %v1557 = vmul.f32 %v1556, 0.6931472
        %v1558 = vmul.f32 -0.5, %v1422
        %v1559 = vadd.f32 %v1558, 1.0
        %v1560 = vmul.f32 %v1559, %v1422
        %v1561 = vand.u32 2147483647, %v1422
        %vm1562 = vcmp.lt.f32.partialorder %v1561, 0.0004427343
        %v1563 = vsel %vm1562, %v1560, %v1557
        %v1564 = vadd.f32 %v1424, 1.0
        %v1565 = vlog2.pop %v1564
        %v1566 = vmul.f32 %v1565, 0.6931472
        %v1567 = vmul.f32 -0.5, %v1424
        %v1568 = vadd.f32 %v1567, 1.0
        %v1569 = vmul.f32 %v1568, %v1424
        %v1570 = vand.u32 2147483647, %v1424
        %vm1571 = vcmp.lt.f32.partialorder %v1570, 0.0004427343
        %v1572 = vsel %vm1571, %v1569, %v1566
        %v1573 = vadd.f32 %v1426, 1.0
        %v1574 = vlog2.pop %v1573
        %v1575 = vmul.f32 %v1574, 0.6931472
        %v1576 = vmul.f32 -0.5, %v1426
        %v1577 = vadd.f32 %v1576, 1.0
        %v1578 = vmul.f32 %v1577, %v1426
        %v1579 = vand.u32 2147483647, %v1426
        %vm1580 = vcmp.lt.f32.partialorder %v1579, 0.0004427343
        %v1581 = vsel %vm1580, %v1578, %v1575
        %v1582 = vadd.f32 %v1428, 1.0
        %v1583 = vlog2.pop %v1582
        %v1584 = vmul.f32 %v1583, 0.6931472
        %v1585 = vmul.f32 -0.5, %v1428
        %v1586 = vadd.f32 %v1585, 1.0
        %v1587 = vmul.f32 %v1586, %v1428
        %v1588 = vand.u32 2147483647, %v1428
        %vm1589 = vcmp.lt.f32.partialorder %v1588, 0.0004427343
        %v1590 = vsel %vm1589, %v1587, %v1584
        %v1591 = vadd.f32 %v1430, 1.0
        %v1592 = vlog2.pop %v1591
        %v1593 = vmul.f32 %v1592, 0.6931472
        %v1594 = vmul.f32 -0.5, %v1430
        %v1595 = vadd.f32 %v1594, 1.0
        %v1596 = vmul.f32 %v1595, %v1430
        %v1597 = vand.u32 2147483647, %v1430
        %vm1598 = vcmp.lt.f32.partialorder %v1597, 0.0004427343
        %v1599 = vsel %vm1598, %v1596, %v1593
        %v1600 = vadd.f32 %v1432, 1.0
        %v1601 = vlog2.pop %v1600
        %v1602 = vmul.f32 %v1601, 0.6931472
        %v1603 = vmul.f32 -0.5, %v1432
        %v1604 = vadd.f32 %v1603, 1.0
        %v1605 = vmul.f32 %v1604, %v1432
        %v1606 = vand.u32 2147483647, %v1432
        %vm1607 = vcmp.lt.f32.partialorder %v1606, 0.0004427343
        %v1608 = vsel %vm1607, %v1605, %v1602
        %v1609 = vadd.f32 %v1434, 1.0
        %v1610 = vlog2.pop %v1609
        %v1611 = vmul.f32 %v1610, 0.6931472
        %v1612 = vmul.f32 -0.5, %v1434
        %v1613 = vadd.f32 %v1612, 1.0
        %v1614 = vmul.f32 %v1613, %v1434
        %v1615 = vand.u32 2147483647, %v1434
        %vm1616 = vcmp.lt.f32.partialorder %v1615, 0.0004427343
        %v1617 = vsel %vm1616, %v1614, %v1611
        %v1618 = vadd.f32 %v1436, 1.0
        %v1619 = vlog2.pop %v1618
        %v1620 = vmul.f32 %v1619, 0.6931472
        %v1621 = vmul.f32 -0.5, %v1436
        %v1622 = vadd.f32 %v1621, 1.0
        %v1623 = vmul.f32 %v1622, %v1436
        %v1624 = vand.u32 2147483647, %v1436
        %vm1625 = vcmp.lt.f32.partialorder %v1624, 0.0004427343
        %v1626 = vsel %vm1625, %v1623, %v1620
        %v1627 = vadd.f32 %v1438, 1.0
        %v1628 = vlog2.pop %v1627
        %v1629 = vmul.f32 %v1628, 0.6931472
        %v1630 = vmul.f32 -0.5, %v1438
        %v1631 = vadd.f32 %v1630, 1.0
        %v1632 = vmul.f32 %v1631, %v1438
        %v1633 = vand.u32 2147483647, %v1438
        %vm1634 = vcmp.lt.f32.partialorder %v1633, 0.0004427343
        %v1635 = vsel %vm1634, %v1632, %v1629
        %v1636 = vadd.f32 %v1440, 1.0
        %v1637 = vlog2.pop %v1636
        %v1638 = vmul.f32 %v1637, 0.6931472
        %v1639 = vmul.f32 -0.5, %v1440
        %v1640 = vadd.f32 %v1639, 1.0
        %v1641 = vmul.f32 %v1640, %v1440
        %v1642 = vand.u32 2147483647, %v1440
        %vm1643 = vcmp.lt.f32.partialorder %v1642, 0.0004427343
        %v1644 = vsel %vm1643, %v1641, %v1638
        %v1645 = vadd.f32 %v1442, 1.0
        %v1646 = vlog2.pop %v1645
        %v1647 = vmul.f32 %v1646, 0.6931472
        %v1648 = vmul.f32 -0.5, %v1442
        %v1649 = vadd.f32 %v1648, 1.0
        %v1650 = vmul.f32 %v1649, %v1442
        %v1651 = vand.u32 2147483647, %v1442
        %vm1652 = vcmp.lt.f32.partialorder %v1651, 0.0004427343
        %v1653 = vsel %vm1652, %v1650, %v1647
        %v1654 = vadd.f32 %v1444, 1.0
        %v1655 = vlog2.pop %v1654
        %v1656 = vmul.f32 %v1655, 0.6931472
        %v1657 = vmul.f32 -0.5, %v1444
        %v1658 = vadd.f32 %v1657, 1.0
        %v1659 = vmul.f32 %v1658, %v1444
        %v1660 = vand.u32 2147483647, %v1444
        %vm1661 = vcmp.lt.f32.partialorder %v1660, 0.0004427343
        %v1662 = vsel %vm1661, %v1659, %v1656
        %v1663 = vadd.f32 %v1446, 1.0
        %v1664 = vlog2.pop %v1663
        %v1665 = vmul.f32 %v1664, 0.6931472
        %v1666 = vmul.f32 -0.5, %v1446
        %v1667 = vadd.f32 %v1666, 1.0
        %v1668 = vmul.f32 %v1667, %v1446
        %v1669 = vand.u32 2147483647, %v1446
        %vm1670 = vcmp.lt.f32.partialorder %v1669, 0.0004427343
        %v1671 = vsel %vm1670, %v1668, %v1665
        %v1672 = vadd.f32 %v1448, 1.0
        %v1673 = vlog2.pop %v1672
        %v1674 = vmul.f32 %v1673, 0.6931472
        %v1675 = vmul.f32 -0.5, %v1448
        %v1676 = vadd.f32 %v1675, 1.0
        %v1677 = vmul.f32 %v1676, %v1448
        %v1678 = vand.u32 2147483647, %v1448
        %vm1679 = vcmp.lt.f32.partialorder %v1678, 0.0004427343
        %v1680 = vsel %vm1679, %v1677, %v1674
        %v1681 = vadd.f32 %v1450, 1.0
        %v1682 = vlog2.pop %v1681
        %v1683 = vmul.f32 %v1682, 0.6931472
        %v1684 = vmul.f32 -0.5, %v1450
        %v1685 = vadd.f32 %v1684, 1.0
        %v1686 = vmul.f32 %v1685, %v1450
        %v1687 = vand.u32 2147483647, %v1450
        %vm1688 = vcmp.lt.f32.partialorder %v1687, 0.0004427343
        %v1689 = vsel %vm1688, %v1686, %v1683
        %v1690 = vadd.f32 %v1452, 1.0
        %v1691 = vlog2.pop %v1690
        %v1692 = vmul.f32 %v1691, 0.6931472
        %v1693 = vmul.f32 -0.5, %v1452
        %v1694 = vadd.f32 %v1693, 1.0
        %v1695 = vmul.f32 %v1694, %v1452
        %v1696 = vand.u32 2147483647, %v1452
        %vm1697 = vcmp.lt.f32.partialorder %v1696, 0.0004427343
        %v1698 = vsel %vm1697, %v1695, %v1692
        %v1699 = vadd.f32 %v1454, 1.0
        %v1700 = vlog2.pop %v1699
        %v1701 = vmul.f32 %v1700, 0.6931472
        %v1702 = vmul.f32 -0.5, %v1454
        %v1703 = vadd.f32 %v1702, 1.0
        %v1704 = vmul.f32 %v1703, %v1454
        %v1705 = vand.u32 2147483647, %v1454
        %vm1706 = vcmp.lt.f32.partialorder %v1705, 0.0004427343
        %v1707 = vsel %vm1706, %v1704, %v1701
        %v1708 = vadd.f32 %v1456, 1.0
        %v1709 = vlog2.pop %v1708
        %v1710 = vmul.f32 %v1709, 0.6931472
        %v1711 = vmul.f32 -0.5, %v1456
        %v1712 = vadd.f32 %v1711, 1.0
        %v1713 = vmul.f32 %v1712, %v1456
        %v1714 = vand.u32 2147483647, %v1456
        %vm1715 = vcmp.lt.f32.partialorder %v1714, 0.0004427343
        %v1716 = vsel %vm1715, %v1713, %v1710
        %v1717 = vadd.f32 %v1458, 1.0
        %v1718 = vlog2.pop %v1717
        %v1719 = vmul.f32 %v1718, 0.6931472
        %v1720 = vmul.f32 -0.5, %v1458
        %v1721 = vadd.f32 %v1720, 1.0
        %v1722 = vmul.f32 %v1721, %v1458
        %v1723 = vand.u32 2147483647, %v1458
        %vm1724 = vcmp.lt.f32.partialorder %v1723, 0.0004427343
        %v1725 = vsel %vm1724, %v1722, %v1719
        %v1726 = vadd.f32 %v1460, 1.0
        %v1727 = vlog2.pop %v1726
        %v1728 = vmul.f32 %v1727, 0.6931472
        %v1729 = vmul.f32 -0.5, %v1460
        %v1730 = vadd.f32 %v1729, 1.0
        %v1731 = vmul.f32 %v1730, %v1460
        %v1732 = vand.u32 2147483647, %v1460
        %vm1733 = vcmp.lt.f32.partialorder %v1732, 0.0004427343
        %v1734 = vsel %vm1733, %v1731, %v1728
        %v1735 = vadd.f32 %v1462, 1.0
        %v1736 = vlog2.pop %v1735
        %v1737 = vmul.f32 %v1736, 0.6931472
        %v1738 = vmul.f32 -0.5, %v1462
        %v1739 = vadd.f32 %v1738, 1.0
        %v1740 = vmul.f32 %v1739, %v1462
        %v1741 = vand.u32 2147483647, %v1462
        %vm1742 = vcmp.lt.f32.partialorder %v1741, 0.0004427343
        %v1743 = vsel %vm1742, %v1740, %v1737
        %v1744 = vadd.f32 %v1464, 1.0
        %v1745 = vlog2.pop %v1744
        %v1746 = vmul.f32 %v1745, 0.6931472
        %v1747 = vmul.f32 -0.5, %v1464
        %v1748 = vadd.f32 %v1747, 1.0
        %v1749 = vmul.f32 %v1748, %v1464
        %v1750 = vand.u32 2147483647, %v1464
        %vm1751 = vcmp.lt.f32.partialorder %v1750, 0.0004427343
        %v1752 = vsel %vm1751, %v1749, %v1746
        %v1753 = vadd.f32 %v1305, %v1473
        %v1754 = vadd.f32 %v1306, %v1482
        %v1755 = vadd.f32 %v1307, %v1491
        %v1756 = vadd.f32 %v1308, %v1500
        %v1757 = vadd.f32 %v1309, %v1509
        %v1758 = vadd.f32 %v1310, %v1518
        %v1759 = vadd.f32 %v1311, %v1527
        %v1760 = vadd.f32 %v1312, %v1536
        %v1761 = vadd.f32 %v1313, %v1545
        %v1762 = vadd.f32 %v1314, %v1554
        %v1763 = vadd.f32 %v1315, %v1563
        %v1764 = vadd.f32 %v1316, %v1572
        %v1765 = vadd.f32 %v1317, %v1581
        %v1766 = vadd.f32 %v1318, %v1590
        %v1767 = vadd.f32 %v1319, %v1599
        %v1768 = vadd.f32 %v1320, %v1608
        %v1769 = vadd.f32 %v1321, %v1617
        %v1770 = vadd.f32 %v1322, %v1626
        %v1771 = vadd.f32 %v1323, %v1635
        %v1772 = vadd.f32 %v1324, %v1644
        %v1773 = vadd.f32 %v1325, %v1653
        %v1774 = vadd.f32 %v1326, %v1662
        %v1775 = vadd.f32 %v1327, %v1671
        %v1776 = vadd.f32 %v1328, %v1680
        %v1777 = vadd.f32 %v1329, %v1689
        %v1778 = vadd.f32 %v1330, %v1698
        %v1779 = vadd.f32 %v1331, %v1707
        %v1780 = vadd.f32 %v1332, %v1716
        %v1781 = vadd.f32 %v1333, %v1725
        %v1782 = vadd.f32 %v1334, %v1734
        %v1783 = vadd.f32 %v1335, %v1743
        %v1784 = vadd.f32 %v1336, %v1752
        %s1785 = sld [smem:[#allocation6]]
        %v1786 = vadd.f32 %v1753, %v1754
        %v1787 = vadd.f32 %v1786, %v1755
        %v1788 = vadd.f32 %v1787, %v1756
        %v1789 = vadd.f32 %v1788, %v1757
        %v1790 = vadd.f32 %v1789, %v1758
        %v1791 = vadd.f32 %v1790, %v1759
        %v1792 = vadd.f32 %v1791, %v1760
        %v1793 = vadd.f32 %v1792, %v1761
        %v1794 = vadd.f32 %v1793, %v1762
        %v1795 = vadd.f32 %v1794, %v1763
        %v1796 = vadd.f32 %v1795, %v1764
        %v1797 = vadd.f32 %v1796, %v1765
        %v1798 = vadd.f32 %v1797, %v1766
        %v1799 = vadd.f32 %v1798, %v1767
        %v1800 = vadd.f32 %v1799, %v1768
        %v1801 = vadd.f32 %v1800, %v1769
        %v1802 = vadd.f32 %v1801, %v1770
        %v1803 = vadd.f32 %v1802, %v1771
        %v1804 = vadd.f32 %v1803, %v1772
        %v1805 = vadd.f32 %v1804, %v1773
        %v1806 = vadd.f32 %v1805, %v1774
        %v1807 = vadd.f32 %v1806, %v1775
        %v1808 = vadd.f32 %v1807, %v1776
        %v1809 = vadd.f32 %v1808, %v1777
        %v1810 = vadd.f32 %v1809, %v1778
        %v1811 = vadd.f32 %v1810, %v1779
        %v1812 = vadd.f32 %v1811, %v1780
        %v1813 = vadd.f32 %v1812, %v1781
        %v1814 = vadd.f32 %v1813, %v1782
        %v1815 = vadd.f32 %v1814, %v1783
        %v1816 = vadd.f32 %v1815, %v1784
        %1817 = vadd.xlane.f32.xlu0 %v1816
        %v1818 = vpop.xlane.xlu0 %1817
        %v1819 = vrot.slane %v1818, 4
        %v1820 = vadd.f32 %v1818, %v1819
        %v1821 = vrot.slane %v1820, 2
        %v1822 = vadd.f32 %v1820, %v1821
        %v1823 = vrot.slane %v1822, 1
        %v1824 = vadd.f32 %v1822, %v1823
        %s1825 = vtos %v1824
        %s1826 = sadd.f32 %s1785, %s1825
        %s1827 = scalar_lea.smem [#allocation6], 0
        %1828 = sst [smem:[%s1827]] %s1826
        %p1829 = scmp.eq.s32.totalorder %s21, 1
        // Predicated region
        $region49: #{tpu_custom_call.1} parent=43 // pred_check
          %p1830 = pneg %p1829
        $region50: #{tpu_custom_call.1} parent=43 // pred_check_branch
          %1832 = sbr.rel (%p1830) target = $region52
        $region51: #{tpu_custom_call.1} parent=43 // pred_region
          %v1833 = vld [vmem:[#allocation3] sm:$0x3]
          %v1834 = vlog2.pop %v1833
          %v1835 = vmul.f32 %v1834, 0.6931472
          %v1836 = vld [vmem:[#allocation2] sm:$0x3]
          %v1837 = vadd.f32 %v1835, %v1836
          %v1839 = vlaneseq
          %v1840 = vshrl.u32 %v1839, 7
          %v1841 = vsub.s32 0, %v1840
          %v1842 = vrot.slane %v1837, %v1841
          %v1843 = vlaneseq
          %v1844 = vshrl.u32 %v1843, 7
          %v1845 = vsub.s32 1, %v1844
          %v1846 = vrot.slane %v1837, %v1845
          %vm1849 = vcmask 1040384
          %v1850 = vsel %vm1849, %v1842, 0.0
          %v1851 = vsel %vm1849, %v1846, 0.0
          %v1852 = vadd.f32 %v1850, %v1851
          %1853 = vadd.xlane.f32.xlu0 %v1852
          %v1854 = vpop.xlane.xlu0 %1853
          %v1855 = vrot.slane %v1854, 4
          %v1856 = vadd.f32 %v1854, %v1855
          %v1857 = vrot.slane %v1856, 2
          %v1858 = vadd.f32 %v1856, %v1857
          %v1859 = vrot.slane %v1858, 1
          %v1860 = vadd.f32 %v1858, %v1859
          %s1861 = vtos %v1860
          %s1862 = sld [smem:[#allocation5]]
          %s1863 = sld [smem:[#allocation4]]
          %s1864 = ssub.f32 %s1863, %s1862
          %s1865 = ssub.f32 %s1861, %s1862
          %s1866 = sadd.f32 %s1864, %s1865
          %s1867 = smul.f32 %s1866, 0.5
          %s1868 = smul.f32 %s1867, 0.00390625
          %s1869 = sld [smem:[#allocation6]]
          %s1870 = ssub.f32 %s1869, %s1862
          %s1871 = smul.f32 %s1870, 1.5258789e-05
          %s1872 = sld [smem:[#allocation8]]
          %s1873 = smul.f32 %s1872, %s1868
          %s1874 = sld [smem:[#allocation9]]
          %s1875 = smul.f32 %s1874, %s1871
          %s1876 = sadd.f32 %s1873, %s1875
          %s1877 = scalar_lea.smem [#allocation10], 0
          %1878 = sst [smem:[%s1877]] %s1876
        $region52: #{tpu_custom_call.1} parent=43 // pred_fallthru
          _
        // Predicated region
        $region53: #{tpu_custom_call.1} parent=43 // pred_check
          %p1879 = pneg %p170
        $region54: #{tpu_custom_call.1} parent=43 // pred_check_branch
          %1881 = sbr.rel (%p1879) target = $region56
        $region55: #{tpu_custom_call.1} parent=43 // pred_region
          %s1883 = ssub.s32 16, 16
          %1884 = vsyncadd [#allocation11], %s1883
          %1887 = dma.smem_to_hbm [#allocation10], 16, %s6, [#allocation11]
        $region56: #{tpu_custom_call.1} parent=43 // pred_fallthru
          _
        // Predicated region
        $region57: #{tpu_custom_call.1} parent=43 // pred_check
          %p1888 = pneg %p170
        $region58: #{tpu_custom_call.1} parent=43 // pred_check_branch
          %1890 = sbr.rel (%p1888) target = $region60
        $region59: #{tpu_custom_call.1} parent=43 // pred_region
          %1891 = dma.done [#allocation11], 16
        $region60: #{tpu_custom_call.1} parent=43 // pred_fallthru
          _
        %1892 = sfence
      $region44: #{tpu_custom_call.1} parent=5 // pred_fallthru
        _
      %p1893 = scmp.le.s32.totalorder 2, %s16
      // Predicated region
      $region61: #{tpu_custom_call.1} parent=5 // pred_check
        %p1894 = pneg %p1893
      $region62: #{tpu_custom_call.1} parent=5 // pred_check_branch
        %1896 = sbr.rel (%p1894) target = $region64
      $region63: #{tpu_custom_call.1} parent=5 // pred_region
        %s1897 = ssub.s32 %s16, 2
      $region64: #{tpu_custom_call.1} parent=5 // pred_fallthru
        _
    $region6: #{tpu_custom_call.1} parent=1 // loop_footer
      %s20 = sadd.s32 1, %s16
    $region7: #{tpu_custom_call.1} parent=1 // loop_footer_branch
      %15 = sbr.rel target = $region3
    $region8: #{tpu_custom_call.1} parent=1 // loop_exit
      _
    %1898 = vsyncpa [#allocation11], 1
    %s1899 = scalar_lea.sflag [#allocation11], 1
    %1900 = vsyncpa %s1899, 1

</llo_original>
